<compile_context>
chip_gen: v7x
topology: tpu7x:2x2x1
jax: 0.10.0
libtpu: 0.0.40
codegen_flags: <defaults>
</compile_context>

<pallas_src>
import functools

import jax
import jax.numpy as jnp
from jax.experimental import pallas as pl
from jax.experimental.pallas import tpu as pltpu


def _round_up(v, m):
    return (v + m - 1) // m * m


def _choose_batch_block(B, L, target_m=256):
    """Pick the per-grid-step batch block.

    Goals (perf review):
      * MXU M dim (tb*L) >= ~256 rows per step, and a multiple of 8 sublanes.
      * >= 2 grid steps when B is large enough, so the "parallel" batch axis can shard
        across v7x's two TensorCores (no-op on single-TC v5e/v6e).
    """
    if B * L <= target_m or B <= 8:
        return B                              # tiny problem: one step, full batch
    tb = -(-target_m // L)                    # ceil: tb*L >= target_m
    tb = min(tb, max(8, (B + 1) // 2))        # keep >= 2 grid steps (v7x megacore)
    tb = max(8, (tb // 8) * 8)                # sublane-aligned batch block (out block rows)
    return min(tb, B)


def pack_textcnn_params(weights, biases, kernel_sizes, *, lane_pad=128,
                        operand_dtype=jnp.float32):
    """Pack Conv2d (OIHW) weights/biases into the kernel's fused layout.

    Call ONCE at parameter-load time (NOT inside the jitted forward): otherwise these small
    transpose/pad/concat ops and the ~150 KB W_all materialization run on every call.

    Returns:
      w_all: (E, sum_i k_i * c_pad)  all taps of all branches, column-concatenated and
                                     zero-padded from C to c_pad lanes, in operand_dtype.
      b_all: (1, n_branches * c_pad) per-branch bias, zero-padded, float32.
    """
    C = weights[0].shape[0]
    c_pad = _round_up(C, lane_pad)
    cols = []
    for w, k in zip(weights, kernel_sizes):
        for j in range(k):
            wj = jnp.asarray(w)[:, 0, j, :].T                      # (E, C)
            cols.append(jnp.pad(wj, ((0, 0), (0, c_pad - C))))
    w_all = jnp.concatenate(cols, axis=1).astype(operand_dtype)
    b_all = jnp.concatenate(
        [jnp.pad(jnp.asarray(b), (0, c_pad - C)) for b in biases]
    ).reshape(1, len(kernel_sizes) * c_pad).astype(jnp.float32)
    return w_all, b_all


def _textcnn_kernel(x_ref, w_ref, b_ref, out_ref, *, kernel_sizes, c_pad, seq_len, use_roll):
    # x_ref:   (TB*L, E)              flattened batch block of the embedded sequence
    # w_ref:   (E, sum_i k_i*c_pad)   all taps of all branches (resident across grid steps)
    # b_ref:   (1, nb*c_pad)          per-branch bias, zero-padded (resident)
    # out_ref: (TB, nb*c_pad)         lane-dense padded output (implicit concat of branches)
    L = seq_len
    M = x_ref.shape[0]
    TB = out_ref.shape[0]

    # ONE MXU matmul covers every tap of every branch (f32 accumulation; operands may be bf16).
    y = jnp.dot(x_ref[...], w_ref[...], preferred_element_type=jnp.float32)   # (M, cols)

    if use_roll:
        # Time index within each sequence; used to mask wrapped / out-of-range time steps
        # just before the max, so every add below runs on full (8,128)-aligned tiles.
        t_idx = jax.lax.broadcasted_iota(jnp.int32, (L, c_pad), 0)[None]       # (1, L, c_pad)
    else:
        y3 = y.reshape(TB, L, y.shape[1])

    col = 0
    for i, k in enumerate(kernel_sizes):                                       # static loop
        T = L - k + 1
        if use_roll:
            # conv_i[r] = sum_j y[r + j, tap_j cols]; the row shift is an XLU sublane rotate
            # on aligned (M, c_pad) tiles (no sublane-retiling copies).  Rows that wrap into
            # the next sequence only land on t >= T positions, which are masked below.
            acc = y[:, col:col + c_pad]
            for j in range(1, k):
                tap = y[:, col + j * c_pad:col + (j + 1) * c_pad]
                acc = acc + pltpu.roll(tap, shift=M - j, axis=0)               # acc[r] += tap[r+j]
            acc = acc.reshape(TB, L, c_pad)
            acc = jnp.where(t_idx < T, acc, -jnp.inf)                          # mask t >= T
        else:
            # Fallback epilogue: static time-shifted (sublane-unaligned) slices.
            acc = y3[:, 0:T, col:col + c_pad]
            for j in range(1, k):
                acc = acc + y3[:, j:j + T, col + j * c_pad:col + (j + 1) * c_pad]
        col += k * c_pad

        m = jnp.max(acc, axis=1)                                               # (TB, c_pad) XLU
        bias = b_ref[:, i * c_pad:(i + 1) * c_pad]                             # (1, c_pad)
        # Deferred bias + ReLU (bias is t-constant, ReLU monotone -> same result as reference).
        out_ref[:, i * c_pad:(i + 1) * c_pad] = jnp.maximum(m + bias, 0.0)


def textcnn_feature_forward(x, w_all, b_all, *, kernel_sizes, kernel_num,
                            batch_block=None, target_m=256, epilogue_roll=True,
                            operand_dtype=None):
    """Pallas implementation of TextCNNFeature.forward.

    x: (B, L, E);  w_all/b_all: packed params from pack_textcnn_params.
    returns: (B, kernel_num * len(kernel_sizes)) float32, columns ordered like torch.cat.
    """
    B, L, E = x.shape
    nb = len(kernel_sizes)
    c_pad = w_all.shape[1] // sum(kernel_sizes)
    if operand_dtype is None:
        operand_dtype = w_all.dtype

    tb = _choose_batch_block(B, L, target_m) if batch_block is None else min(batch_block, B)
    grid = (pl.cdiv(B, tb),)
    w_cols = w_all.shape[1]
    use_roll = bool(epilogue_roll) and ((tb * L) % 8 == 0)

    x2 = x.reshape(B * L, E).astype(operand_dtype)       # M dim explicit; no in-kernel reshape
    w_all = w_all.astype(operand_dtype)
    b_all = b_all.astype(jnp.float32)

    # Explicit VMEM budget (v7x only has 64 MiB physical / 32 MiB default scoped):
    ebytes = jnp.dtype(operand_dtype).itemsize
    m_rows = tb * L
    est = (2 * m_rows * E * ebytes                         # double-buffered x blocks
           + 2 * tb * nb * c_pad * 4                       # double-buffered out blocks
           + 2 * (E * w_cols * ebytes + nb * c_pad * 4)    # resident W / bias
           + 4 * m_rows * w_cols * 4)                      # y + epilogue temporaries (generous)
    vmem_limit = int(min(100 * 2**20, max(32 * 2**20, 2 * est)))

    kernel = functools.partial(_textcnn_kernel, kernel_sizes=tuple(kernel_sizes),
                               c_pad=c_pad, seq_len=L, use_roll=use_roll)

    out_pad = pl.pallas_call(
        kernel,
        out_shape=jax.ShapeDtypeStruct((B, nb * c_pad), jnp.float32),
        grid=grid,
        in_specs=[
            pl.BlockSpec((tb * L, E), lambda b: (b, 0)),          # batch-blocked flattened x
            pl.BlockSpec((E, w_cols), lambda b: (0, 0)),          # resident packed weights
            pl.BlockSpec((1, nb * c_pad), lambda b: (0, 0)),      # resident bias
        ],
        out_specs=pl.BlockSpec((tb, nb * c_pad), lambda b: (b, 0)),   # lane-dense output
        compiler_params=pltpu.CompilerParams(
            dimension_semantics=("parallel",),
            vmem_limit_bytes=vmem_limit),
    )(x2, w_all, b_all)

    # Slice padded lanes back to kernel_num per branch; column order matches torch.cat(x_list, 1).
    return out_pad.reshape(B, nb, c_pad)[:, :, :kernel_num].reshape(B, nb * kernel_num)


def _reference_forward(x, weights, biases, kernel_sizes):
    # Faithful plain-JAX reference using conv_general_dilated (NCHW, like PyTorch Conv2d).
    xi = x[:, None, :, :]                                              # (B, 1, L, E)
    outs = []
    for w, b in zip(weights, biases):
        conv = jax.lax.conv_general_dilated(
            xi, w, window_strides=(1, 1), padding="VALID",
            dimension_numbers=("NCHW", "OIHW", "NCHW"))                # (B, C, T, 1)
        conv = conv + b[None, :, None, None]
        conv = jnp.maximum(conv, 0.0)[:, :, :, 0]                      # (B, C, T)
        outs.append(jnp.max(conv, axis=2))                             # (B, C)
    return jnp.concatenate(outs, axis=1)


if __name__ == "__main__":
    B, L, E = 2, 8, 32
    kernel_sizes = (2, 3, 4)
    kernel_num = 100  # default in the module

    key = jax.random.PRNGKey(0)
    kx, *kws = jax.random.split(key, 1 + 2 * len(kernel_sizes))
    x = jax.random.normal(kx, (B, L, E), dtype=jnp.float32)

    weights, biases = [], []
    for i, k in enumerate(kernel_sizes):
        kw, kb = kws[2 * i], kws[2 * i + 1]
        weights.append(0.1 * jax.random.normal(kw, (kernel_num, 1, k, E), dtype=jnp.float32))
        biases.append(0.01 * jax.random.normal(kb, (kernel_num,), dtype=jnp.float32))

    ref = _reference_forward(x, weights, biases, kernel_sizes)

    def build_fwd(use_roll):
        return jax.jit(functools.partial(
            textcnn_feature_forward, kernel_sizes=kernel_sizes,
            kernel_num=kernel_num, epilogue_roll=use_roll))

    # ---- f32 operand path: strict check against the conv reference -------------------------
    w32, b32 = pack_textcnn_params(weights, biases, kernel_sizes, operand_dtype=jnp.float32)

    roll_ok = True
    try:
        out32 = jax.block_until_ready(build_fwd(True)(x, w32, b32))
        roll_ok = bool(jnp.allclose(out32, ref, atol=1e-4, rtol=1e-4))
    except Exception:
        roll_ok = False
    if not roll_ok:
        # XLU-rotate epilogue unavailable/mismatched on this toolchain -> slice-based epilogue.
        out32 = jax.block_until_ready(build_fwd(False)(x, w32, b32))

    assert out32.shape == (B, kernel_num * len(kernel_sizes)), out32.shape
    assert jnp.allclose(out32, ref, atol=1e-4, rtol=1e-4), float(jnp.max(jnp.abs(out32 - ref)))

    # ---- bf16 operand path (halved DMA bytes, bf16-native MXU on v6e/v7x): loose check ------
    wbf, bbf = pack_textcnn_params(weights, biases, kernel_sizes, operand_dtype=jnp.bfloat16)
    outbf = jax.block_until_ready(build_fwd(roll_ok)(x, wbf, bbf))
    assert jnp.allclose(outbf, ref, atol=5e-2, rtol=5e-2), float(jnp.max(jnp.abs(outbf - ref)))

    print("KERNEL_OK")
</pallas_src>

<mosaic_0001>
module attributes {stable_mosaic.version = 11 : i64} {
  func.func @_textcnn_kernel(%arg0: i32, %arg1: memref<16x32xf32, #tpu.memory_space<vmem>>, %arg2: memref<32x1152xf32, #tpu.memory_space<vmem>>, %arg3: memref<1x384xf32, #tpu.memory_space<vmem>>, %arg4: memref<2x384xf32, #tpu.memory_space<vmem>>) attributes {dimension_semantics = [#tpu.dimension_semantics<parallel>], iteration_bounds = array<i64: 1>, scalar_prefetch = 0 : i64, scratch_operands = 0 : i64, tpu.core_type = #tpu.core_type<tc>, window_params = [{transform_indices = @transform_0, window_bounds = array<i64: 16, 32>}, {pipeline_mode = #tpu.pipeline_mode<synchronous>, transform_indices = @transform_1, window_bounds = array<i64: 32, 1152>}, {pipeline_mode = #tpu.pipeline_mode<synchronous>, transform_indices = @transform_2, window_bounds = array<i64: 1, 384>}, {transform_indices = @transform_3, window_bounds = array<i64: 2, 384>}]} {
    %c0 = arith.constant 0 : index
    %c0_0 = arith.constant 0 : index
    %0 = vector.load %arg1[%c0, %c0_0] : memref<16x32xf32, #tpu.memory_space<vmem>>, vector<16x32xf32>
    %c0_1 = arith.constant 0 : index
    %c0_2 = arith.constant 0 : index
    %1 = vector.load %arg2[%c0_1, %c0_2] : memref<32x1152xf32, #tpu.memory_space<vmem>>, vector<32x1152xf32>
    %cst = arith.constant dense<0.000000e+00> : vector<16x1152xf32>
    %2 = tpu.matmul %0, %1, %cst {dimension_numbers = #tpu.dot_dimension_numbers<[1], [0], [0], [1], [0, 0, 1, 1], [], []>} : vector<16x32xf32>, vector<32x1152xf32>, vector<16x1152xf32> -> vector<16x1152xf32>
    %3 = tpu.iota {dimensions = array<i32: 0>} : vector<8x128xi32>
    %4 = vector.shape_cast %3 : vector<8x128xi32> to vector<1x8x128xi32>
    %5 = vector.extract_strided_slice %2 {offsets = [0, 0], sizes = [16, 128], strides = [1, 1]} : vector<16x1152xf32> to vector<16x128xf32>
    %6 = vector.extract_strided_slice %2 {offsets = [0, 128], sizes = [16, 128], strides = [1, 1]} : vector<16x1152xf32> to vector<16x128xf32>
    %c15_i32 = arith.constant 15 : i32
    %7 = tpu.dynamic_rotate %6 by %c15_i32 dim 0 : vector<16x128xf32>, i32 -> vector<16x128xf32>
    %8 = arith.addf %5, %7 : vector<16x128xf32>
    %9 = vector.shape_cast %8 : vector<16x128xf32> to vector<2x8x128xf32>
    %c7_i32 = arith.constant 7 : i32
    %10 = vector.broadcast %c7_i32 : i32 to vector<1x8x128xi32>
    %11 = arith.cmpi slt, %4, %10 : vector<1x8x128xi32>
    %cst_3 = arith.constant 0xFF800000 : f32
    %12 = vector.shape_cast %11 : vector<1x8x128xi1> to vector<1x8x128xi1>
    %13 = vector.broadcast %12 : vector<1x8x128xi1> to vector<2x8x128xi1>
    %14 = vector.broadcast %cst_3 : f32 to vector<2x8x128xf32>
    %15 = arith.select %13, %9, %14 : vector<2x8x128xi1>, vector<2x8x128xf32>
    %cst_4 = arith.constant dense<0xFF800000> : vector<2x128xf32>
    %16 = vector.multi_reduction <maximumf>, %15, %cst_4 [1] : vector<2x8x128xf32> to vector<2x128xf32>
    %c0_5 = arith.constant 0 : index
    %c0_6 = arith.constant 0 : index
    %17 = vector.load %arg3[%c0_5, %c0_6] : memref<1x384xf32, #tpu.memory_space<vmem>>, vector<1x128xf32>
    %18 = vector.broadcast %17 : vector<1x128xf32> to vector<2x128xf32>
    %19 = arith.addf %16, %18 : vector<2x128xf32>
    %cst_7 = arith.constant 0.000000e+00 : f32
    %20 = vector.broadcast %cst_7 : f32 to vector<2x128xf32>
    %21 = arith.maximumf %19, %20 : vector<2x128xf32>
    %c0_8 = arith.constant 0 : index
    %c0_9 = arith.constant 0 : index
    %22 = vector.load %arg4[%c0_8, %c0_9] : memref<2x384xf32, #tpu.memory_space<vmem>>, vector<2x128xf32>
    tpu.vector_store %arg4[%c0_8, %c0_9], %21 {strides = array<i32>} : memref<2x384xf32, #tpu.memory_space<vmem>>, vector<2x128xf32>,
    %23 = vector.extract_strided_slice %2 {offsets = [0, 256], sizes = [16, 128], strides = [1, 1]} : vector<16x1152xf32> to vector<16x128xf32>
    %24 = vector.extract_strided_slice %2 {offsets = [0, 384], sizes = [16, 128], strides = [1, 1]} : vector<16x1152xf32> to vector<16x128xf32>
    %c15_i32_10 = arith.constant 15 : i32
    %25 = tpu.dynamic_rotate %24 by %c15_i32_10 dim 0 : vector<16x128xf32>, i32 -> vector<16x128xf32>
    %26 = arith.addf %23, %25 : vector<16x128xf32>
    %27 = vector.extract_strided_slice %2 {offsets = [0, 512], sizes = [16, 128], strides = [1, 1]} : vector<16x1152xf32> to vector<16x128xf32>
    %c14_i32 = arith.constant 14 : i32
    %28 = tpu.dynamic_rotate %27 by %c14_i32 dim 0 : vector<16x128xf32>, i32 -> vector<16x128xf32>
    %29 = arith.addf %26, %28 : vector<16x128xf32>
    %30 = vector.shape_cast %29 : vector<16x128xf32> to vector<2x8x128xf32>
    %c6_i32 = arith.constant 6 : i32
    %31 = vector.broadcast %c6_i32 : i32 to vector<1x8x128xi32>
    %32 = arith.cmpi slt, %4, %31 : vector<1x8x128xi32>
    %cst_11 = arith.constant 0xFF800000 : f32
    %33 = vector.shape_cast %32 : vector<1x8x128xi1> to vector<1x8x128xi1>
    %34 = vector.broadcast %33 : vector<1x8x128xi1> to vector<2x8x128xi1>
    %35 = vector.broadcast %cst_11 : f32 to vector<2x8x128xf32>
    %36 = arith.select %34, %30, %35 : vector<2x8x128xi1>, vector<2x8x128xf32>
    %cst_12 = arith.constant dense<0xFF800000> : vector<2x128xf32>
    %37 = vector.multi_reduction <maximumf>, %36, %cst_12 [1] : vector<2x8x128xf32> to vector<2x128xf32>
    %c0_13 = arith.constant 0 : index
    %c128 = arith.constant 128 : index
    %38 = vector.load %arg3[%c0_13, %c128] : memref<1x384xf32, #tpu.memory_space<vmem>>, vector<1x128xf32>
    %39 = vector.broadcast %38 : vector<1x128xf32> to vector<2x128xf32>
    %40 = arith.addf %37, %39 : vector<2x128xf32>
    %cst_14 = arith.constant 0.000000e+00 : f32
    %41 = vector.broadcast %cst_14 : f32 to vector<2x128xf32>
    %42 = arith.maximumf %40, %41 : vector<2x128xf32>
    %c0_15 = arith.constant 0 : index
    %c128_16 = arith.constant 128 : index
    %43 = vector.load %arg4[%c0_15, %c128_16] : memref<2x384xf32, #tpu.memory_space<vmem>>, vector<2x128xf32>
    tpu.vector_store %arg4[%c0_15, %c128_16], %42 {strides = array<i32>} : memref<2x384xf32, #tpu.memory_space<vmem>>, vector<2x128xf32>,
    %44 = vector.extract_strided_slice %2 {offsets = [0, 640], sizes = [16, 128], strides = [1, 1]} : vector<16x1152xf32> to vector<16x128xf32>
    %45 = vector.extract_strided_slice %2 {offsets = [0, 768], sizes = [16, 128], strides = [1, 1]} : vector<16x1152xf32> to vector<16x128xf32>
    %c15_i32_17 = arith.constant 15 : i32
    %46 = tpu.dynamic_rotate %45 by %c15_i32_17 dim 0 : vector<16x128xf32>, i32 -> vector<16x128xf32>
    %47 = arith.addf %44, %46 : vector<16x128xf32>
    %48 = vector.extract_strided_slice %2 {offsets = [0, 896], sizes = [16, 128], strides = [1, 1]} : vector<16x1152xf32> to vector<16x128xf32>
    %c14_i32_18 = arith.constant 14 : i32
    %49 = tpu.dynamic_rotate %48 by %c14_i32_18 dim 0 : vector<16x128xf32>, i32 -> vector<16x128xf32>
    %50 = arith.addf %47, %49 : vector<16x128xf32>
    %51 = vector.extract_strided_slice %2 {offsets = [0, 1024], sizes = [16, 128], strides = [1, 1]} : vector<16x1152xf32> to vector<16x128xf32>
    %c13_i32 = arith.constant 13 : i32
    %52 = tpu.dynamic_rotate %51 by %c13_i32 dim 0 : vector<16x128xf32>, i32 -> vector<16x128xf32>
    %53 = arith.addf %50, %52 : vector<16x128xf32>
    %54 = vector.shape_cast %53 : vector<16x128xf32> to vector<2x8x128xf32>
    %c5_i32 = arith.constant 5 : i32
    %55 = vector.broadcast %c5_i32 : i32 to vector<1x8x128xi32>
    %56 = arith.cmpi slt, %4, %55 : vector<1x8x128xi32>
    %cst_19 = arith.constant 0xFF800000 : f32
    %57 = vector.shape_cast %56 : vector<1x8x128xi1> to vector<1x8x128xi1>
    %58 = vector.broadcast %57 : vector<1x8x128xi1> to vector<2x8x128xi1>
    %59 = vector.broadcast %cst_19 : f32 to vector<2x8x128xf32>
    %60 = arith.select %58, %54, %59 : vector<2x8x128xi1>, vector<2x8x128xf32>
    %cst_20 = arith.constant dense<0xFF800000> : vector<2x128xf32>
    %61 = vector.multi_reduction <maximumf>, %60, %cst_20 [1] : vector<2x8x128xf32> to vector<2x128xf32>
    %c0_21 = arith.constant 0 : index
    %c256 = arith.constant 256 : index
    %62 = vector.load %arg3[%c0_21, %c256] : memref<1x384xf32, #tpu.memory_space<vmem>>, vector<1x128xf32>
    %63 = vector.broadcast %62 : vector<1x128xf32> to vector<2x128xf32>
    %64 = arith.addf %61, %63 : vector<2x128xf32>
    %cst_22 = arith.constant 0.000000e+00 : f32
    %65 = vector.broadcast %cst_22 : f32 to vector<2x128xf32>
    %66 = arith.maximumf %64, %65 : vector<2x128xf32>
    %c0_23 = arith.constant 0 : index
    %c256_24 = arith.constant 256 : index
    %67 = vector.load %arg4[%c0_23, %c256_24] : memref<2x384xf32, #tpu.memory_space<vmem>>, vector<2x128xf32>
    tpu.vector_store %arg4[%c0_23, %c256_24], %66 {strides = array<i32>} : memref<2x384xf32, #tpu.memory_space<vmem>>, vector<2x128xf32>,
    return
  }
  func.func @transform_0(%arg0: i32) -> (i32, i32) {
    %c0_i32 = arith.constant 0 : i32
    %c0_i32_0 = arith.constant 0 : i32
    return %arg0, %c0_i32 : i32, i32
  }
  func.func @transform_1(%arg0: i32) -> (i32, i32) {
    %c0_i32 = arith.constant 0 : i32
    %c0_i32_0 = arith.constant 0 : i32
    %c0_i32_1 = arith.constant 0 : i32
    return %c0_i32, %c0_i32_0 : i32, i32
  }
  func.func @transform_2(%arg0: i32) -> (i32, i32) {
    %c0_i32 = arith.constant 0 : i32
    %c0_i32_0 = arith.constant 0 : i32
    %c0_i32_1 = arith.constant 0 : i32
    return %c0_i32, %c0_i32_0 : i32, i32
  }
  func.func @transform_3(%arg0: i32) -> (i32, i32) {
    %c0_i32 = arith.constant 0 : i32
    %c0_i32_0 = arith.constant 0 : i32
    return %arg0, %c0_i32 : i32, i32
  }
}

module attributes {stable_mosaic.version = 11 : i64} {
  func.func @_textcnn_kernel(%arg0: i32, %arg1: memref<16x32xf32, #tpu.memory_space<vmem>>, %arg2: memref<32x1152xf32, #tpu.memory_space<vmem>>, %arg3: memref<1x384xf32, #tpu.memory_space<vmem>>, %arg4: memref<2x384xf32, #tpu.memory_space<vmem>>) attributes {dimension_semantics = [#tpu.dimension_semantics<parallel>], iteration_bounds = array<i64: 1>, scalar_prefetch = 0 : i64, scratch_operands = 0 : i64, tpu.core_type = #tpu.core_type<tc>, window_params = [{transform_indices = @transform_0, window_bounds = array<i64: 16, 32>}, {pipeline_mode = #tpu.pipeline_mode<synchronous>, transform_indices = @transform_1, window_bounds = array<i64: 32, 1152>}, {pipeline_mode = #tpu.pipeline_mode<synchronous>, transform_indices = @transform_2, window_bounds = array<i64: 1, 384>}, {transform_indices = @transform_3, window_bounds = array<i64: 2, 384>}]} {
    %c0 = arith.constant 0 : index
    %c0_0 = arith.constant 0 : index
    %0 = vector.load %arg1[%c0, %c0_0] : memref<16x32xf32, #tpu.memory_space<vmem>>, vector<16x32xf32>
    %c0_1 = arith.constant 0 : index
    %c0_2 = arith.constant 0 : index
    %1 = vector.load %arg2[%c0_1, %c0_2] : memref<32x1152xf32, #tpu.memory_space<vmem>>, vector<32x1152xf32>
    %cst = arith.constant dense<0.000000e+00> : vector<16x1152xf32>
    %2 = tpu.matmul %0, %1, %cst {dimension_numbers = #tpu.dot_dimension_numbers<[1], [0], [0], [1], [0, 0, 1, 1], [], []>} : vector<16x32xf32>, vector<32x1152xf32>, vector<16x1152xf32> -> vector<16x1152xf32>
    %3 = vector.shape_cast %2 : vector<16x1152xf32> to vector<2x8x1152xf32>
    %4 = vector.extract_strided_slice %3 {offsets = [0, 0, 0], sizes = [2, 7, 128], strides = [1, 1, 1]} : vector<2x8x1152xf32> to vector<2x7x128xf32>
    %5 = vector.extract_strided_slice %3 {offsets = [0, 1, 128], sizes = [2, 7, 128], strides = [1, 1, 1]} : vector<2x8x1152xf32> to vector<2x7x128xf32>
    %6 = arith.addf %4, %5 : vector<2x7x128xf32>
    %cst_3 = arith.constant dense<0xFF800000> : vector<2x128xf32>
    %7 = vector.multi_reduction <maximumf>, %6, %cst_3 [1] : vector<2x7x128xf32> to vector<2x128xf32>
    %c0_4 = arith.constant 0 : index
    %c0_5 = arith.constant 0 : index
    %8 = vector.load %arg3[%c0_4, %c0_5] : memref<1x384xf32, #tpu.memory_space<vmem>>, vector<1x128xf32>
    %9 = vector.broadcast %8 : vector<1x128xf32> to vector<2x128xf32>
    %10 = arith.addf %7, %9 : vector<2x128xf32>
    %cst_6 = arith.constant 0.000000e+00 : f32
    %11 = vector.broadcast %cst_6 : f32 to vector<2x128xf32>
    %12 = arith.maximumf %10, %11 : vector<2x128xf32>
    %c0_7 = arith.constant 0 : index
    %c0_8 = arith.constant 0 : index
    %13 = vector.load %arg4[%c0_7, %c0_8] : memref<2x384xf32, #tpu.memory_space<vmem>>, vector<2x128xf32>
    tpu.vector_store %arg4[%c0_7, %c0_8], %12 {strides = array<i32>} : memref<2x384xf32, #tpu.memory_space<vmem>>, vector<2x128xf32>,
    %14 = vector.extract_strided_slice %3 {offsets = [0, 0, 256], sizes = [2, 6, 128], strides = [1, 1, 1]} : vector<2x8x1152xf32> to vector<2x6x128xf32>
    %15 = vector.extract_strided_slice %3 {offsets = [0, 1, 384], sizes = [2, 6, 128], strides = [1, 1, 1]} : vector<2x8x1152xf32> to vector<2x6x128xf32>
    %16 = arith.addf %14, %15 : vector<2x6x128xf32>
    %17 = vector.extract_strided_slice %3 {offsets = [0, 2, 512], sizes = [2, 6, 128], strides = [1, 1, 1]} : vector<2x8x1152xf32> to vector<2x6x128xf32>
    %18 = arith.addf %16, %17 : vector<2x6x128xf32>
    %cst_9 = arith.constant dense<0xFF800000> : vector<2x128xf32>
    %19 = vector.multi_reduction <maximumf>, %18, %cst_9 [1] : vector<2x6x128xf32> to vector<2x128xf32>
    %c0_10 = arith.constant 0 : index
    %c128 = arith.constant 128 : index
    %20 = vector.load %arg3[%c0_10, %c128] : memref<1x384xf32, #tpu.memory_space<vmem>>, vector<1x128xf32>
    %21 = vector.broadcast %20 : vector<1x128xf32> to vector<2x128xf32>
    %22 = arith.addf %19, %21 : vector<2x128xf32>
    %cst_11 = arith.constant 0.000000e+00 : f32
    %23 = vector.broadcast %cst_11 : f32 to vector<2x128xf32>
    %24 = arith.maximumf %22, %23 : vector<2x128xf32>
    %c0_12 = arith.constant 0 : index
    %c128_13 = arith.constant 128 : index
    %25 = vector.load %arg4[%c0_12, %c128_13] : memref<2x384xf32, #tpu.memory_space<vmem>>, vector<2x128xf32>
    tpu.vector_store %arg4[%c0_12, %c128_13], %24 {strides = array<i32>} : memref<2x384xf32, #tpu.memory_space<vmem>>, vector<2x128xf32>,
    %26 = vector.extract_strided_slice %3 {offsets = [0, 0, 640], sizes = [2, 5, 128], strides = [1, 1, 1]} : vector<2x8x1152xf32> to vector<2x5x128xf32>
    %27 = vector.extract_strided_slice %3 {offsets = [0, 1, 768], sizes = [2, 5, 128], strides = [1, 1, 1]} : vector<2x8x1152xf32> to vector<2x5x128xf32>
    %28 = arith.addf %26, %27 : vector<2x5x128xf32>
    %29 = vector.extract_strided_slice %3 {offsets = [0, 2, 896], sizes = [2, 5, 128], strides = [1, 1, 1]} : vector<2x8x1152xf32> to vector<2x5x128xf32>
    %30 = arith.addf %28, %29 : vector<2x5x128xf32>
    %31 = vector.extract_strided_slice %3 {offsets = [0, 3, 1024], sizes = [2, 5, 128], strides = [1, 1, 1]} : vector<2x8x1152xf32> to vector<2x5x128xf32>
    %32 = arith.addf %30, %31 : vector<2x5x128xf32>
    %cst_14 = arith.constant dense<0xFF800000> : vector<2x128xf32>
    %33 = vector.multi_reduction <maximumf>, %32, %cst_14 [1] : vector<2x5x128xf32> to vector<2x128xf32>
    %c0_15 = arith.constant 0 : index
    %c256 = arith.constant 256 : index
    %34 = vector.load %arg3[%c0_15, %c256] : memref<1x384xf32, #tpu.memory_space<vmem>>, vector<1x128xf32>
    %35 = vector.broadcast %34 : vector<1x128xf32> to vector<2x128xf32>
    %36 = arith.addf %33, %35 : vector<2x128xf32>
    %cst_16 = arith.constant 0.000000e+00 : f32
    %37 = vector.broadcast %cst_16 : f32 to vector<2x128xf32>
    %38 = arith.maximumf %36, %37 : vector<2x128xf32>
    %c0_17 = arith.constant 0 : index
    %c256_18 = arith.constant 256 : index
    %39 = vector.load %arg4[%c0_17, %c256_18] : memref<2x384xf32, #tpu.memory_space<vmem>>, vector<2x128xf32>
    tpu.vector_store %arg4[%c0_17, %c256_18], %38 {strides = array<i32>} : memref<2x384xf32, #tpu.memory_space<vmem>>, vector<2x128xf32>,
    return
  }
  func.func @transform_0(%arg0: i32) -> (i32, i32) {
    %c0_i32 = arith.constant 0 : i32
    %c0_i32_0 = arith.constant 0 : i32
    return %arg0, %c0_i32 : i32, i32
  }
  func.func @transform_1(%arg0: i32) -> (i32, i32) {
    %c0_i32 = arith.constant 0 : i32
    %c0_i32_0 = arith.constant 0 : i32
    %c0_i32_1 = arith.constant 0 : i32
    return %c0_i32, %c0_i32_0 : i32, i32
  }
  func.func @transform_2(%arg0: i32) -> (i32, i32) {
    %c0_i32 = arith.constant 0 : i32
    %c0_i32_0 = arith.constant 0 : i32
    %c0_i32_1 = arith.constant 0 : i32
    return %c0_i32, %c0_i32_0 : i32, i32
  }
  func.func @transform_3(%arg0: i32) -> (i32, i32) {
    %c0_i32 = arith.constant 0 : i32
    %c0_i32_0 = arith.constant 0 : i32
    return %arg0, %c0_i32 : i32, i32
  }
}

</mosaic_0001>

<llo_original>
// kernel: textcnn_feature_forward.1
$region0: #{textcnn_feature_forward.1}
  #allocation0 [shape = 'u32[]', space=smem, size = 0x4, offset = 0x4, fixed_abs, tag = 'smem constant byte address 0x4 - core index']
  #allocation1 [shape = 'u32[144,128]{1,0:T(1,128)}', space=vmem, size = 0x12000, scoped, tag = 'internal scratch']
  %s0 = inlined_call_operand.hbm [shape: f32[16,32], index: 0, kind: input, shape index: {}]
  %s1 = inlined_call_operand.hbm [shape: f32[32,1152], index: 1, kind: input, shape index: {}]
  %s2 = inlined_call_operand.vmem [shape: f32[1,384], index: 2, kind: input, shape index: {}]
  %s3 = inlined_call_operand.vmem [shape: f32[2,384], index: 3, kind: output, shape index: {}]
  %s4 = sld [smem:[#allocation0]]
  $region30: #{textcnn_feature_forward.1} parent=0
    _
  %s6 = ssub.s32 1, %s4
  %s7 = scalar_select 0, %s6, %s4
  $region1: #{textcnn_feature_forward.1} parent=0
    #allocation2 [shape = 'u8[8192]{0}', space=vmem, size = 0x2000, scoped, tag = 'input window, operand 0, single buffered']
    #allocation3 [shape = 's32[1]{0}', space=sflag, size = 0x4, scoped, tag = 'scoped memory for textcnn_feature_forward.1']
    #allocation4 [shape = 'u8[147456]{0}', space=vmem, size = 0x24000, scoped, tag = 'input window, operand 1, single buffered']
    #allocation5 [shape = 's32[1]{0}', space=sflag, size = 0x4, scoped, tag = 'scoped memory for textcnn_feature_forward.1']
    %8 = vsyncpa [#allocation3], 0
    %9 = vsyncpa [#allocation5], 0
    // Predicated region
    $region2: #{textcnn_feature_forward.1} parent=1 // pred_check
      _
    $region3: #{textcnn_feature_forward.1} parent=1 // pred_check_branch
      %11 = sbr.rel (0) target = $region5
    $region4: #{textcnn_feature_forward.1} parent=1 // pred_region
      %s13 = ssub.s32 256, 256
      %14 = vsyncadd [#allocation3], %s13
      %s15 = sshll.u32 [#allocation2], 4
      %s16 = int_to_ptr.vmem [resolvable:$true] %s15
      %21 = dma.hbm_to_vmem [thread:$0]  %s0, 256, %s16, [#allocation3], 128, 128, 8
    $region5: #{textcnn_feature_forward.1} parent=1 // pred_fallthru
      _
    // Predicated region
    $region6: #{textcnn_feature_forward.1} parent=1 // pred_check
      _
    $region7: #{textcnn_feature_forward.1} parent=1 // pred_check_branch
      %23 = sbr.rel (0) target = $region9
    $region8: #{textcnn_feature_forward.1} parent=1 // pred_region
      %s25 = ssub.s32 4608, 4608
      %26 = vsyncadd [#allocation5], %s25
      %s27 = sshll.u32 [#allocation4], 4
      %s28 = int_to_ptr.vmem [resolvable:$true] %s27
      %33 = dma.hbm_to_vmem [thread:$0]  %s1, 4608, %s28, [#allocation5], 1152, 1152, 72
    $region9: #{textcnn_feature_forward.1} parent=1 // pred_fallthru
      _
    // Predicated region
    $region10: #{textcnn_feature_forward.1} parent=1 // pred_check
      _
    $region11: #{textcnn_feature_forward.1} parent=1 // pred_check_branch
      %35 = sbr.rel (0) target = $region13
    $region12: #{textcnn_feature_forward.1} parent=1 // pred_region
      _
    $region13: #{textcnn_feature_forward.1} parent=1 // pred_fallthru
      _
    // Predicated region
    $region14: #{textcnn_feature_forward.1} parent=1 // pred_check
      _
    $region15: #{textcnn_feature_forward.1} parent=1 // pred_check_branch
      %37 = sbr.rel (0) target = $region17
    $region16: #{textcnn_feature_forward.1} parent=1 // pred_region
      %38 = dma.done [#allocation3], 256
    $region17: #{textcnn_feature_forward.1} parent=1 // pred_fallthru
      _
    // Predicated region
    $region18: #{textcnn_feature_forward.1} parent=1 // pred_check
      _
    $region19: #{textcnn_feature_forward.1} parent=1 // pred_check_branch
      %40 = sbr.rel (0) target = $region21
    $region20: #{textcnn_feature_forward.1} parent=1 // pred_region
      %41 = dma.done [#allocation5], 4608
    $region21: #{textcnn_feature_forward.1} parent=1 // pred_fallthru
      _
    %v42 = vld [vmem:[#allocation2] sm:$0xff]
    %v43 = vld [vmem:[#allocation2 + $0x8] sm:$0xff]
    %v44 = vld [vmem:[#allocation4] sm:$0xff]
    %v45 = vld [vmem:[#allocation4 + $0x8] sm:$0xff]
    %v46 = vld [vmem:[#allocation4 + $0x10] sm:$0xff]
    %v47 = vld [vmem:[#allocation4 + $0x18] sm:$0xff]
    %v48 = vld [vmem:[#allocation4 + $0x20] sm:$0xff]
    %v49 = vld [vmem:[#allocation4 + $0x28] sm:$0xff]
    %v50 = vld [vmem:[#allocation4 + $0x30] sm:$0xff]
    %v51 = vld [vmem:[#allocation4 + $0x38] sm:$0xff]
    %v52 = vld [vmem:[#allocation4 + $0x40] sm:$0xff]
    %v53 = vld [vmem:[#allocation4 + $0x48] sm:$0xff]
    %v54 = vld [vmem:[#allocation4 + $0x50] sm:$0xff]
    %v55 = vld [vmem:[#allocation4 + $0x58] sm:$0xff]
    %v56 = vld [vmem:[#allocation4 + $0x60] sm:$0xff]
    %v57 = vld [vmem:[#allocation4 + $0x68] sm:$0xff]
    %v58 = vld [vmem:[#allocation4 + $0x70] sm:$0xff]
    %v59 = vld [vmem:[#allocation4 + $0x78] sm:$0xff]
    %v60 = vld [vmem:[#allocation4 + $0x80] sm:$0xff]
    %v61 = vld [vmem:[#allocation4 + $0x88] sm:$0xff]
    %v62 = vld [vmem:[#allocation4 + $0x90] sm:$0xff]
    %v63 = vld [vmem:[#allocation4 + $0x98] sm:$0xff]
    %v64 = vld [vmem:[#allocation4 + $0xa0] sm:$0xff]
    %v65 = vld [vmem:[#allocation4 + $0xa8] sm:$0xff]
    %v66 = vld [vmem:[#allocation4 + $0xb0] sm:$0xff]
    %v67 = vld [vmem:[#allocation4 + $0xb8] sm:$0xff]
    %v68 = vld [vmem:[#allocation4 + $0xc0] sm:$0xff]
    %v69 = vld [vmem:[#allocation4 + $0xc8] sm:$0xff]
    %v70 = vld [vmem:[#allocation4 + $0xd0] sm:$0xff]
    %v71 = vld [vmem:[#allocation4 + $0xd8] sm:$0xff]
    %v72 = vld [vmem:[#allocation4 + $0xe0] sm:$0xff]
    %v73 = vld [vmem:[#allocation4 + $0xe8] sm:$0xff]
    %v74 = vld [vmem:[#allocation4 + $0xf0] sm:$0xff]
    %v75 = vld [vmem:[#allocation4 + $0xf8] sm:$0xff]
    %v76 = vld [vmem:[#allocation4 + $0x100] sm:$0xff]
    %v77 = vld [vmem:[#allocation4 + $0x108] sm:$0xff]
    %v78 = vld [vmem:[#allocation4 + $0x110] sm:$0xff]
    %v79 = vld [vmem:[#allocation4 + $0x118] sm:$0xff]
    %vm80 = vcmask 261120
    %v82 = vsel %vm80, %v42, 0
    %v85 = vsel %vm80, %v43, 0
    %87 = vmatprep.subr.mxu0 %v45
    %88 = vmatpush1.msra.mxu0 %v44
    %89 = vmatprep.subr.mxu0 %v54
    %90 = vmatpush1.msra.mxu0 %v53
    %91 = vmatprep.subr.mxu0 %v63
    %92 = vmatpush1.msra.mxu0 %v62
    %93 = vmatprep.subr.mxu0 %v72
    %94 = vmatpush1.msra.mxu0 %v71
    %95 = vmatprep.subr.mxu0 0.0
    %96 = vmatpush1.msra.mxu0 0.0
    %97 = vmatprep.subr.mxu0 0.0
    %98 = vmatpush1.msra.mxu0 0.0
    %99 = vmatprep.subr.mxu0 0.0
    %100 = vmatpush1.msra.mxu0 0.0
    %101 = vmatprep.subr.mxu0 0.0
    %102 = vmatpush1.msra.mxu0 0.0
    %103 = vmatprep.subr.mxu0 0.0
    %104 = vmatpush1.msra.mxu0 0.0
    %105 = vmatprep.subr.mxu0 0.0
    %106 = vmatpush1.msra.mxu0 0.0
    %107 = vmatprep.subr.mxu0 0.0
    %108 = vmatpush1.msra.mxu0 0.0
    %109 = vmatprep.subr.mxu0 0.0
    %110 = vmatpush1.msra.mxu0 0.0
    %111 = vmatprep.subr.mxu0 0.0
    %112 = vmatpush1.msra.mxu0 0.0
    %113 = vmatprep.subr.mxu0 0.0
    %114 = vmatpush1.msra.mxu0 0.0
    %115 = vmatprep.subr.mxu0 0.0
    %116 = vmatpush1.msra.mxu0 0.0
    %117 = vmatprep.subr.mxu0 0.0
    %118 = vmatpush1.msra.mxu0 0.0
    %119 = vmatprep.subr.mxu0 0.0
    %120 = vmatpush1.msra.mxu0 0.0
    %121 = vmatprep.subr.mxu0 0.0
    %122 = vmatpush1.msra.mxu0 0.0
    %123 = vmatprep.subr.mxu0 0.0
    %124 = vmatpush1.msra.mxu0 0.0
    %125 = vmatprep.subr.mxu0 0.0
    %126 = vmatpush1.msra.mxu0 0.0
    %127 = vmatprep.subr.mxu0 0.0
    %128 = vmatpush1.msra.mxu0 0.0
    %129 = vmatprep.subr.mxu0 0.0
    %130 = vmatpush1.msra.mxu0 0.0
    %131 = vmatprep.subr.mxu0 0.0
    %132 = vmatpush1.msra.mxu0 0.0
    %133 = vmatprep.subr.mxu0 0.0
    %134 = vmatpush1.msra.mxu0 0.0
    %135 = vmatprep.subr.mxu0 0.0
    %136 = vmatpush1.msra.mxu0 0.0
    %137 = vmatprep.subr.mxu0 0.0
    %138 = vmatpush1.msra.mxu0 0.0
    %139 = vmatprep.subr.mxu0 0.0
    %140 = vmatpush1.msra.mxu0 0.0
    %141 = vmatprep.subr.mxu0 0.0
    %142 = vmatpush1.msra.mxu0 0.0
    %143 = vmatprep.subr.mxu0 0.0
    %144 = vmatpush1.msra.mxu0 0.0
    %145 = vmatprep.subr.mxu0 0.0
    %146 = vmatpush1.msra.mxu0 0.0
    %147 = vmatprep.subr.mxu0 0.0
    %148 = vmatpush1.msra.mxu0 0.0
    %149 = vmatprep.subr.mxu0 0.0
    %150 = vmatpush1.msra.mxu0 0.0
    %151 = vmatprep.mubr.f32.mxu0 0.0
    %152 = vmatmul.mubr.f32.gmra.mrb[0].mxu0 %v82
    %v153 = vpop.f32.mrb[0].mxu0
    %v154 = vadd.f32 0.0, %v153
    %v155 = vpop.f32.mrb[0].mxu0
    %v156 = vadd.f32 0.0, %v155
    %157 = vmatprep.mubr.f32.mxu0 0.0
    %158 = vmatmul.mubr.f32.gmra.mrb[0].mxu0 %v85
    %v159 = vpop.f32.mrb[0].mxu0
    %v160 = vadd.f32 0.0, %v159
    %v161 = vpop.f32.mrb[0].mxu0
    %v162 = vadd.f32 0.0, %v161
    %163 = vdwg.mxu0
    %164 = vmatprep.subr.mxu0 %v47
    %165 = vmatpush1.msra.mxu0 %v46
    %166 = vmatprep.subr.mxu0 %v56
    %167 = vmatpush1.msra.mxu0 %v55
    %168 = vmatprep.subr.mxu0 %v65
    %169 = vmatpush1.msra.mxu0 %v64
    %170 = vmatprep.subr.mxu0 %v74
    %171 = vmatpush1.msra.mxu0 %v73
    %172 = vmatprep.subr.mxu0 0.0
    %173 = vmatpush1.msra.mxu0 0.0
    %174 = vmatprep.subr.mxu0 0.0
    %175 = vmatpush1.msra.mxu0 0.0
    %176 = vmatprep.subr.mxu0 0.0
    %177 = vmatpush1.msra.mxu0 0.0
    %178 = vmatprep.subr.mxu0 0.0
    %179 = vmatpush1.msra.mxu0 0.0
    %180 = vmatprep.subr.mxu0 0.0
    %181 = vmatpush1.msra.mxu0 0.0
    %182 = vmatprep.subr.mxu0 0.0
    %183 = vmatpush1.msra.mxu0 0.0
    %184 = vmatprep.subr.mxu0 0.0
    %185 = vmatpush1.msra.mxu0 0.0
    %186 = vmatprep.subr.mxu0 0.0
    %187 = vmatpush1.msra.mxu0 0.0
    %188 = vmatprep.subr.mxu0 0.0
    %189 = vmatpush1.msra.mxu0 0.0
    %190 = vmatprep.subr.mxu0 0.0
    %191 = vmatpush1.msra.mxu0 0.0
    %192 = vmatprep.subr.mxu0 0.0
    %193 = vmatpush1.msra.mxu0 0.0
    %194 = vmatprep.subr.mxu0 0.0
    %195 = vmatpush1.msra.mxu0 0.0
    %196 = vmatprep.subr.mxu0 0.0
    %197 = vmatpush1.msra.mxu0 0.0
    %198 = vmatprep.subr.mxu0 0.0
    %199 = vmatpush1.msra.mxu0 0.0
    %200 = vmatprep.subr.mxu0 0.0
    %201 = vmatpush1.msra.mxu0 0.0
    %202 = vmatprep.subr.mxu0 0.0
    %203 = vmatpush1.msra.mxu0 0.0
    %204 = vmatprep.subr.mxu0 0.0
    %205 = vmatpush1.msra.mxu0 0.0
    %206 = vmatprep.subr.mxu0 0.0
    %207 = vmatpush1.msra.mxu0 0.0
    %208 = vmatprep.subr.mxu0 0.0
    %209 = vmatpush1.msra.mxu0 0.0
    %210 = vmatprep.subr.mxu0 0.0
    %211 = vmatpush1.msra.mxu0 0.0
    %212 = vmatprep.subr.mxu0 0.0
    %213 = vmatpush1.msra.mxu0 0.0
    %214 = vmatprep.subr.mxu0 0.0
    %215 = vmatpush1.msra.mxu0 0.0
    %216 = vmatprep.subr.mxu0 0.0
    %217 = vmatpush1.msra.mxu0 0.0
    %218 = vmatprep.subr.mxu0 0.0
    %219 = vmatpush1.msra.mxu0 0.0
    %220 = vmatprep.subr.mxu0 0.0
    %221 = vmatpush1.msra.mxu0 0.0
    %222 = vmatprep.subr.mxu0 0.0
    %223 = vmatpush1.msra.mxu0 0.0
    %224 = vmatprep.subr.mxu0 0.0
    %225 = vmatpush1.msra.mxu0 0.0
    %226 = vmatprep.subr.mxu0 0.0
    %227 = vmatpush1.msra.mxu0 0.0
    %228 = vmatprep.mubr.f32.mxu0 0.0
    %229 = vmatmul.mubr.f32.gmra.mrb[0].mxu0 %v82
    %v230 = vpop.f32.mrb[0].mxu0
    %v231 = vadd.f32 0.0, %v230
    %v232 = vpop.f32.mrb[0].mxu0
    %v233 = vadd.f32 0.0, %v232
    %234 = vmatprep.mubr.f32.mxu0 0.0
    %235 = vmatmul.mubr.f32.gmra.mrb[0].mxu0 %v85
    %v236 = vpop.f32.mrb[0].mxu0
    %v237 = vadd.f32 0.0, %v236
    %v238 = vpop.f32.mrb[0].mxu0
    %v239 = vadd.f32 0.0, %v238
    %240 = vdwg.mxu0
    %241 = vmatprep.subr.mxu0 %v49
    %242 = vmatpush1.msra.mxu0 %v48
    %243 = vmatprep.subr.mxu0 %v58
    %244 = vmatpush1.msra.mxu0 %v57
    %245 = vmatprep.subr.mxu0 %v67
    %246 = vmatpush1.msra.mxu0 %v66
    %247 = vmatprep.subr.mxu0 %v76
    %248 = vmatpush1.msra.mxu0 %v75
    %249 = vmatprep.subr.mxu0 0.0
    %250 = vmatpush1.msra.mxu0 0.0
    %251 = vmatprep.subr.mxu0 0.0
    %252 = vmatpush1.msra.mxu0 0.0
    %253 = vmatprep.subr.mxu0 0.0
    %254 = vmatpush1.msra.mxu0 0.0
    %255 = vmatprep.subr.mxu0 0.0
    %256 = vmatpush1.msra.mxu0 0.0
    %257 = vmatprep.subr.mxu0 0.0
    %258 = vmatpush1.msra.mxu0 0.0
    %259 = vmatprep.subr.mxu0 0.0
    %260 = vmatpush1.msra.mxu0 0.0
    %261 = vmatprep.subr.mxu0 0.0
    %262 = vmatpush1.msra.mxu0 0.0
    %263 = vmatprep.subr.mxu0 0.0
    %264 = vmatpush1.msra.mxu0 0.0
    %265 = vmatprep.subr.mxu0 0.0
    %266 = vmatpush1.msra.mxu0 0.0
    %267 = vmatprep.subr.mxu0 0.0
    %268 = vmatpush1.msra.mxu0 0.0
    %269 = vmatprep.subr.mxu0 0.0
    %270 = vmatpush1.msra.mxu0 0.0
    %271 = vmatprep.subr.mxu0 0.0
    %272 = vmatpush1.msra.mxu0 0.0
    %273 = vmatprep.subr.mxu0 0.0
    %274 = vmatpush1.msra.mxu0 0.0
    %275 = vmatprep.subr.mxu0 0.0
    %276 = vmatpush1.msra.mxu0 0.0
    %277 = vmatprep.subr.mxu0 0.0
    %278 = vmatpush1.msra.mxu0 0.0
    %279 = vmatprep.subr.mxu0 0.0
    %280 = vmatpush1.msra.mxu0 0.0
    %281 = vmatprep.subr.mxu0 0.0
    %282 = vmatpush1.msra.mxu0 0.0
    %283 = vmatprep.subr.mxu0 0.0
    %284 = vmatpush1.msra.mxu0 0.0
    %285 = vmatprep.subr.mxu0 0.0
    %286 = vmatpush1.msra.mxu0 0.0
    %287 = vmatprep.subr.mxu0 0.0
    %288 = vmatpush1.msra.mxu0 0.0
    %289 = vmatprep.subr.mxu0 0.0
    %290 = vmatpush1.msra.mxu0 0.0
    %291 = vmatprep.subr.mxu0 0.0
    %292 = vmatpush1.msra.mxu0 0.0
    %293 = vmatprep.subr.mxu0 0.0
    %294 = vmatpush1.msra.mxu0 0.0
    %295 = vmatprep.subr.mxu0 0.0
    %296 = vmatpush1.msra.mxu0 0.0
    %297 = vmatprep.subr.mxu0 0.0
    %298 = vmatpush1.msra.mxu0 0.0
    %299 = vmatprep.subr.mxu0 0.0
    %300 = vmatpush1.msra.mxu0 0.0
    %301 = vmatprep.subr.mxu0 0.0
    %302 = vmatpush1.msra.mxu0 0.0
    %303 = vmatprep.subr.mxu0 0.0
    %304 = vmatpush1.msra.mxu0 0.0
    %305 = vmatprep.mubr.f32.mxu0 0.0
    %306 = vmatmul.mubr.f32.gmra.mrb[0].mxu0 %v82
    %v307 = vpop.f32.mrb[0].mxu0
    %v308 = vadd.f32 0.0, %v307
    %v309 = vpop.f32.mrb[0].mxu0
    %v310 = vadd.f32 0.0, %v309
    %311 = vmatprep.mubr.f32.mxu0 0.0
    %312 = vmatmul.mubr.f32.gmra.mrb[0].mxu0 %v85
    %v313 = vpop.f32.mrb[0].mxu0
    %v314 = vadd.f32 0.0, %v313
    %v315 = vpop.f32.mrb[0].mxu0
    %v316 = vadd.f32 0.0, %v315
    %317 = vdwg.mxu0
    %318 = vmatprep.subr.mxu0 %v51
    %319 = vmatpush1.msra.mxu0 %v50
    %320 = vmatprep.subr.mxu0 %v60
    %321 = vmatpush1.msra.mxu0 %v59
    %322 = vmatprep.subr.mxu0 %v69
    %323 = vmatpush1.msra.mxu0 %v68
    %324 = vmatprep.subr.mxu0 %v78
    %325 = vmatpush1.msra.mxu0 %v77
    %326 = vmatprep.subr.mxu0 0.0
    %327 = vmatpush1.msra.mxu0 0.0
    %328 = vmatprep.subr.mxu0 0.0
    %329 = vmatpush1.msra.mxu0 0.0
    %330 = vmatprep.subr.mxu0 0.0
    %331 = vmatpush1.msra.mxu0 0.0
    %332 = vmatprep.subr.mxu0 0.0
    %333 = vmatpush1.msra.mxu0 0.0
    %334 = vmatprep.subr.mxu0 0.0
    %335 = vmatpush1.msra.mxu0 0.0
    %336 = vmatprep.subr.mxu0 0.0
    %337 = vmatpush1.msra.mxu0 0.0
    %338 = vmatprep.subr.mxu0 0.0
    %339 = vmatpush1.msra.mxu0 0.0
    %340 = vmatprep.subr.mxu0 0.0
    %341 = vmatpush1.msra.mxu0 0.0
    %342 = vmatprep.subr.mxu0 0.0
    %343 = vmatpush1.msra.mxu0 0.0
    %344 = vmatprep.subr.mxu0 0.0
    %345 = vmatpush1.msra.mxu0 0.0
    %346 = vmatprep.subr.mxu0 0.0
    %347 = vmatpush1.msra.mxu0 0.0
    %348 = vmatprep.subr.mxu0 0.0
    %349 = vmatpush1.msra.mxu0 0.0
    %350 = vmatprep.subr.mxu0 0.0
    %351 = vmatpush1.msra.mxu0 0.0
    %352 = vmatprep.subr.mxu0 0.0
    %353 = vmatpush1.msra.mxu0 0.0
    %354 = vmatprep.subr.mxu0 0.0
    %355 = vmatpush1.msra.mxu0 0.0
    %356 = vmatprep.subr.mxu0 0.0
    %357 = vmatpush1.msra.mxu0 0.0
    %358 = vmatprep.subr.mxu0 0.0
    %359 = vmatpush1.msra.mxu0 0.0
    %360 = vmatprep.subr.mxu0 0.0
    %361 = vmatpush1.msra.mxu0 0.0
    %362 = vmatprep.subr.mxu0 0.0
    %363 = vmatpush1.msra.mxu0 0.0
    %364 = vmatprep.subr.mxu0 0.0
    %365 = vmatpush1.msra.mxu0 0.0
    %366 = vmatprep.subr.mxu0 0.0
    %367 = vmatpush1.msra.mxu0 0.0
    %368 = vmatprep.subr.mxu0 0.0
    %369 = vmatpush1.msra.mxu0 0.0
    %370 = vmatprep.subr.mxu0 0.0
    %371 = vmatpush1.msra.mxu0 0.0
    %372 = vmatprep.subr.mxu0 0.0
    %373 = vmatpush1.msra.mxu0 0.0
    %374 = vmatprep.subr.mxu0 0.0
    %375 = vmatpush1.msra.mxu0 0.0
    %376 = vmatprep.subr.mxu0 0.0
    %377 = vmatpush1.msra.mxu0 0.0
    %378 = vmatprep.subr.mxu0 0.0
    %379 = vmatpush1.msra.mxu0 0.0
    %380 = vmatprep.subr.mxu0 0.0
    %381 = vmatpush1.msra.mxu0 0.0
    %382 = vmatprep.mubr.f32.mxu0 0.0
    %383 = vmatmul.mubr.f32.gmra.mrb[0].mxu0 %v82
    %v384 = vpop.f32.mrb[0].mxu0
    %v385 = vadd.f32 0.0, %v384
    %v386 = vpop.f32.mrb[0].mxu0
    %v387 = vadd.f32 0.0, %v386
    %388 = vmatprep.mubr.f32.mxu0 0.0
    %389 = vmatmul.mubr.f32.gmra.mrb[0].mxu0 %v85
    %v390 = vpop.f32.mrb[0].mxu0
    %v391 = vadd.f32 0.0, %v390
    %v392 = vpop.f32.mrb[0].mxu0
    %v393 = vadd.f32 0.0, %v392
    %394 = vdwg.mxu0
    %395 = vmatprep.subr.mxu0 0.0
    %396 = vmatpush1.msra.mxu0 %v52
    %397 = vmatprep.subr.mxu0 0.0
    %398 = vmatpush1.msra.mxu0 %v61
    %399 = vmatprep.subr.mxu0 0.0
    %400 = vmatpush1.msra.mxu0 %v70
    %401 = vmatprep.subr.mxu0 0.0
    %402 = vmatpush1.msra.mxu0 %v79
    %403 = vmatprep.subr.mxu0 0.0
    %404 = vmatpush1.msra.mxu0 0.0
    %405 = vmatprep.subr.mxu0 0.0
    %406 = vmatpush1.msra.mxu0 0.0
    %407 = vmatprep.subr.mxu0 0.0
    %408 = vmatpush1.msra.mxu0 0.0
    %409 = vmatprep.subr.mxu0 0.0
    %410 = vmatpush1.msra.mxu0 0.0
    %411 = vmatprep.subr.mxu0 0.0
    %412 = vmatpush1.msra.mxu0 0.0
    %413 = vmatprep.subr.mxu0 0.0
    %414 = vmatpush1.msra.mxu0 0.0
    %415 = vmatprep.subr.mxu0 0.0
    %416 = vmatpush1.msra.mxu0 0.0
    %417 = vmatprep.subr.mxu0 0.0
    %418 = vmatpush1.msra.mxu0 0.0
    %419 = vmatprep.subr.mxu0 0.0
    %420 = vmatpush1.msra.mxu0 0.0
    %421 = vmatprep.subr.mxu0 0.0
    %422 = vmatpush1.msra.mxu0 0.0
    %423 = vmatprep.subr.mxu0 0.0
    %424 = vmatpush1.msra.mxu0 0.0
    %425 = vmatprep.subr.mxu0 0.0
    %426 = vmatpush1.msra.mxu0 0.0
    %427 = vmatprep.subr.mxu0 0.0
    %428 = vmatpush1.msra.mxu0 0.0
    %429 = vmatprep.subr.mxu0 0.0
    %430 = vmatpush1.msra.mxu0 0.0
    %431 = vmatprep.subr.mxu0 0.0
    %432 = vmatpush1.msra.mxu0 0.0
    %433 = vmatprep.subr.mxu0 0.0
    %434 = vmatpush1.msra.mxu0 0.0
    %435 = vmatprep.subr.mxu0 0.0
    %436 = vmatpush1.msra.mxu0 0.0
    %437 = vmatprep.subr.mxu0 0.0
    %438 = vmatpush1.msra.mxu0 0.0
    %439 = vmatprep.subr.mxu0 0.0
    %440 = vmatpush1.msra.mxu0 0.0
    %441 = vmatprep.subr.mxu0 0.0
    %442 = vmatpush1.msra.mxu0 0.0
    %443 = vmatprep.subr.mxu0 0.0
    %444 = vmatpush1.msra.mxu0 0.0
    %445 = vmatprep.subr.mxu0 0.0
    %446 = vmatpush1.msra.mxu0 0.0
    %447 = vmatprep.subr.mxu0 0.0
    %448 = vmatpush1.msra.mxu0 0.0
    %449 = vmatprep.subr.mxu0 0.0
    %450 = vmatpush1.msra.mxu0 0.0
    %451 = vmatprep.subr.mxu0 0.0
    %452 = vmatpush1.msra.mxu0 0.0
    %453 = vmatprep.subr.mxu0 0.0
    %454 = vmatpush1.msra.mxu0 0.0
    %455 = vmatprep.subr.mxu0 0.0
    %456 = vmatpush1.msra.mxu0 0.0
    %457 = vmatprep.subr.mxu0 0.0
    %458 = vmatpush1.msra.mxu0 0.0
    %459 = vmatprep.mubr.f32.mxu0 0.0
    %460 = vmatmul.mubr.f32.gmra.mrb[0].mxu0 %v82
    %v461 = vpop.f32.mrb[0].mxu0
    %v462 = vadd.f32 0.0, %v461
    %v463 = vpop.f32.mrb[0].mxu0
    %464 = vmatprep.mubr.f32.mxu0 0.0
    %465 = vmatmul.mubr.f32.gmra.mrb[0].mxu0 %v85
    %v466 = vpop.f32.mrb[0].mxu0
    %v467 = vadd.f32 0.0, %v466
    %v468 = vpop.f32.mrb[0].mxu0
    %469 = vdwg.mxu0
    %v470 = vlaneseq
    %v471 = vshrl.u32 %v470, 7
    %v472 = vrot.slane %v156, 1
    %v473 = vrot.slane %v162, 1
    %vm474 = vcmp.lt.s32.totalorder %v471, 7
    %v475 = vsel %vm474, %v472, %v473
    %v476 = vsel %vm474, %v473, %v472
    %v477 = vadd.f32 %v154, %v475
    %v478 = vadd.f32 %v160, %v476
    %v479 = vsel %vm474, 1, 0
    %vm480 = vcmp.eq.s32.totalorder %v479, 1
    %v481 = vsel %vm480, %v477, -inf
    %v482 = vsel %vm480, %v478, -inf
    %v483 = vrot.slane %v481, 4
    %v484 = vmax.f32 %v481, %v483
    %v485 = vrot.slane %v484, 2
    %v486 = vmax.f32 %v484, %v485
    %v487 = vrot.slane %v486, 1
    %v488 = vmax.f32 %v486, %v487
    %v489 = vrot.slane %v482, 4
    %v490 = vmax.f32 %v482, %v489
    %v491 = vrot.slane %v490, 2
    %v492 = vmax.f32 %v490, %v491
    %v493 = vrot.slane %v492, 1
    %v494 = vmax.f32 %v492, %v493
    %v495 = vld [vmem:[%s2] sm:$0x1]
    %v497 = vlaneseq
    %v498 = vshrl.u32 %v497, 7
    %v499 = vsub.s32 0, %v498
    %v500 = vrot.slane %v495, %v499
    %v502 = vadd.f32 %v488, %v500
    %v503 = vadd.f32 %v494, %v500
    %v504 = vmax.f32 %v502, 0.0
    %v505 = vmax.f32 %v503, 0.0
    %v509 = vunpack.c.l.s4 1983009808
    %v510 = vunpack.c.0.s8 %v509
    %v511 = vlaneseq
    %v512 = vshrl.u32 %v511, 7
    %v513 = vsub.s32 %v510, %v512
    %v514 = vrot.slane %v504, %v513
    %v516 = vunpack.c.l.s4 1983009808
    %v517 = vunpack.c.0.s8 %v516
    %v518 = vlaneseq
    %v519 = vshrl.u32 %v518, 7
    %v520 = vsub.s32 %v517, %v519
    %v521 = vrot.slane %v505, %v520
    %vm522 = vcmask 1044484
    %v523 = vsel %vm522, %v514, %v514
    %vm524 = vcmask 1046534
    %v525 = vsel %vm524, %v514, %v523
    %v526 = vrot.slane %v521, 7
    %vm527 = vcmask 1041409
    %v528 = vsel %vm527, %v526, %v525
    %vm529 = vcmask 1043459
    %v530 = vsel %vm529, %v526, %v528
    %vm531 = vcmask 1045509
    %v532 = vsel %vm531, %v526, %v530
    %vm533 = vcmask 1047559
    %v534 = vsel %vm533, %v526, %v532
    %536 = vst [vmem:[%s3] sm:$0x3] %v534
    %v537 = vrot.slane %v233, 1
    %v538 = vrot.slane %v239, 1
    %v539 = vsel %vm474, %v537, %v538
    %v540 = vsel %vm474, %v538, %v537
    %v541 = vadd.f32 %v231, %v539
    %v542 = vadd.f32 %v237, %v540
    %v543 = vrot.slane %v308, 2
    %v544 = vrot.slane %v314, 2
    %vm545 = vcmp.lt.s32.totalorder %v471, 6
    %v546 = vsel %vm545, %v543, %v544
    %v547 = vsel %vm545, %v544, %v543
    %v548 = vadd.f32 %v541, %v546
    %v549 = vadd.f32 %v542, %v547
    %v550 = vsel %vm545, 1, 0
    %vm551 = vcmp.eq.s32.totalorder %v550, 1
    %v552 = vsel %vm551, %v548, -inf
    %v553 = vsel %vm551, %v549, -inf
    %v554 = vrot.slane %v552, 4
    %v555 = vmax.f32 %v552, %v554
    %v556 = vrot.slane %v555, 2
    %v557 = vmax.f32 %v555, %v556
    %v558 = vrot.slane %v557, 1
    %v559 = vmax.f32 %v557, %v558
    %v560 = vrot.slane %v553, 4
    %v561 = vmax.f32 %v553, %v560
    %v562 = vrot.slane %v561, 2
    %v563 = vmax.f32 %v561, %v562
    %v564 = vrot.slane %v563, 1
    %v565 = vmax.f32 %v563, %v564
    %v566 = vld [vmem:[%s2 + $0x1] sm:$0x1]
    %v568 = vlaneseq
    %v569 = vshrl.u32 %v568, 7
    %v570 = vsub.s32 0, %v569
    %v571 = vrot.slane %v566, %v570
    %v573 = vadd.f32 %v559, %v571
    %v574 = vadd.f32 %v565, %v571
    %v575 = vmax.f32 %v573, 0.0
    %v576 = vmax.f32 %v574, 0.0
    %v580 = vunpack.c.l.s4 1983009808
    %v581 = vunpack.c.0.s8 %v580
    %v582 = vlaneseq
    %v583 = vshrl.u32 %v582, 7
    %v584 = vsub.s32 %v581, %v583
    %v585 = vrot.slane %v575, %v584
    %v587 = vunpack.c.l.s4 1983009808
    %v588 = vunpack.c.0.s8 %v587
    %v589 = vlaneseq
    %v590 = vshrl.u32 %v589, 7
    %v591 = vsub.s32 %v588, %v590
    %v592 = vrot.slane %v576, %v591
    %v593 = vsel %vm522, %v585, %v585
    %v594 = vsel %vm524, %v585, %v593
    %v595 = vrot.slane %v592, 7
    %v596 = vsel %vm527, %v595, %v594
    %v597 = vsel %vm529, %v595, %v596
    %v598 = vsel %vm531, %v595, %v597
    %v599 = vsel %vm533, %v595, %v598
    %601 = vst [vmem:[%s3 + $0x2] sm:$0x3] %v599
    %v602 = vrot.slane %v385, 1
    %v603 = vrot.slane %v391, 1
    %v604 = vsel %vm474, %v602, %v603
    %v605 = vsel %vm474, %v603, %v602
    %v606 = vadd.f32 %v310, %v604
    %v607 = vadd.f32 %v316, %v605
    %v608 = vrot.slane %v387, 2
    %v609 = vrot.slane %v393, 2
    %v610 = vsel %vm545, %v608, %v609
    %v611 = vsel %vm545, %v609, %v608
    %v612 = vadd.f32 %v606, %v610
    %v613 = vadd.f32 %v607, %v611
    %v614 = vrot.slane %v462, 3
    %v615 = vrot.slane %v467, 3
    %vm616 = vcmp.lt.s32.totalorder %v471, 5
    %v617 = vsel %vm616, %v614, %v615
    %v618 = vsel %vm616, %v615, %v614
    %v619 = vadd.f32 %v612, %v617
    %v620 = vadd.f32 %v613, %v618
    %v621 = vsel %vm616, 1, 0
    %vm622 = vcmp.eq.s32.totalorder %v621, 1
    %v623 = vsel %vm622, %v619, -inf
    %v624 = vsel %vm622, %v620, -inf
    %v625 = vrot.slane %v623, 4
    %v626 = vmax.f32 %v623, %v625
    %v627 = vrot.slane %v626, 2
    %v628 = vmax.f32 %v626, %v627
    %v629 = vrot.slane %v628, 1
    %v630 = vmax.f32 %v628, %v629
    %v631 = vrot.slane %v624, 4
    %v632 = vmax.f32 %v624, %v631
    %v633 = vrot.slane %v632, 2
    %v634 = vmax.f32 %v632, %v633
    %v635 = vrot.slane %v634, 1
    %v636 = vmax.f32 %v634, %v635
    %v637 = vld [vmem:[%s2 + $0x2] sm:$0x1]
    %v639 = vlaneseq
    %v640 = vshrl.u32 %v639, 7
    %v641 = vsub.s32 0, %v640
    %v642 = vrot.slane %v637, %v641
    %v644 = vadd.f32 %v630, %v642
    %v645 = vadd.f32 %v636, %v642
    %v646 = vmax.f32 %v644, 0.0
    %v647 = vmax.f32 %v645, 0.0
    %v651 = vunpack.c.l.s4 1983009808
    %v652 = vunpack.c.0.s8 %v651
    %v653 = vlaneseq
    %v654 = vshrl.u32 %v653, 7
    %v655 = vsub.s32 %v652, %v654
    %v656 = vrot.slane %v646, %v655
    %v658 = vunpack.c.l.s4 1983009808
    %v659 = vunpack.c.0.s8 %v658
    %v660 = vlaneseq
    %v661 = vshrl.u32 %v660, 7
    %v662 = vsub.s32 %v659, %v661
    %v663 = vrot.slane %v647, %v662
    %v664 = vsel %vm522, %v656, %v656
    %v665 = vsel %vm524, %v656, %v664
    %v666 = vrot.slane %v663, 7
    %v667 = vsel %vm527, %v666, %v665
    %v668 = vsel %vm529, %v666, %v667
    %v669 = vsel %vm531, %v666, %v668
    %v670 = vsel %vm533, %v666, %v669
    %672 = vst [vmem:[%s3 + $0x4] sm:$0x3] %v670
    // Predicated region
    $region22: #{textcnn_feature_forward.1} parent=1 // pred_check
      _
    $region23: #{textcnn_feature_forward.1} parent=1 // pred_check_branch
      %674 = sbr.rel (0) target = $region25
    $region24: #{textcnn_feature_forward.1} parent=1 // pred_region
      _
    $region25: #{textcnn_feature_forward.1} parent=1 // pred_fallthru
      _
    // Predicated region
    $region26: #{textcnn_feature_forward.1} parent=1 // pred_check
      _
    $region27: #{textcnn_feature_forward.1} parent=1 // pred_check_branch
      %676 = sbr.rel (0) target = $region29
    $region28: #{textcnn_feature_forward.1} parent=1 // pred_region
      _
    $region29: #{textcnn_feature_forward.1} parent=1 // pred_fallthru
      _
    %677 = vsyncpa [#allocation3], 1
    %678 = vsyncpa [#allocation5], 1

// kernel: textcnn_feature_forward.1
$region0: #{textcnn_feature_forward.1}
  #allocation0 [shape = 'u32[]', space=smem, size = 0x4, offset = 0x4, fixed_abs, tag = 'smem constant byte address 0x4 - core index']
  #allocation1 [shape = 'u32[144,128]{1,0:T(1,128)}', space=vmem, size = 0x12000, scoped, tag = 'internal scratch']
  %s0 = inlined_call_operand.hbm [shape: f32[16,32], index: 0, kind: input, shape index: {}]
  %s1 = inlined_call_operand.hbm [shape: f32[32,1152], index: 1, kind: input, shape index: {}]
  %s2 = inlined_call_operand.vmem [shape: f32[1,384], index: 2, kind: input, shape index: {}]
  %s3 = inlined_call_operand.vmem [shape: f32[2,384], index: 3, kind: output, shape index: {}]
  %s4 = sld [smem:[#allocation0]]
  $region30: #{textcnn_feature_forward.1} parent=0
    _
  %s6 = ssub.s32 1, %s4
  %s7 = scalar_select 0, %s6, %s4
  $region1: #{textcnn_feature_forward.1} parent=0
    #allocation2 [shape = 'u8[8192]{0}', space=vmem, size = 0x2000, scoped, tag = 'input window, operand 0, single buffered']
    #allocation3 [shape = 's32[1]{0}', space=sflag, size = 0x4, scoped, tag = 'scoped memory for textcnn_feature_forward.1']
    #allocation4 [shape = 'u8[147456]{0}', space=vmem, size = 0x24000, scoped, tag = 'input window, operand 1, single buffered']
    #allocation5 [shape = 's32[1]{0}', space=sflag, size = 0x4, scoped, tag = 'scoped memory for textcnn_feature_forward.1']
    %8 = vsyncpa [#allocation3], 0
    %9 = vsyncpa [#allocation5], 0
    // Predicated region
    $region2: #{textcnn_feature_forward.1} parent=1 // pred_check
      _
    $region3: #{textcnn_feature_forward.1} parent=1 // pred_check_branch
      %11 = sbr.rel (0) target = $region5
    $region4: #{textcnn_feature_forward.1} parent=1 // pred_region
      %s13 = ssub.s32 256, 256
      %14 = vsyncadd [#allocation3], %s13
      %s15 = sshll.u32 [#allocation2], 4
      %s16 = int_to_ptr.vmem [resolvable:$true] %s15
      %21 = dma.hbm_to_vmem [thread:$0]  %s0, 256, %s16, [#allocation3], 128, 128, 8
    $region5: #{textcnn_feature_forward.1} parent=1 // pred_fallthru
      _
    // Predicated region
    $region6: #{textcnn_feature_forward.1} parent=1 // pred_check
      _
    $region7: #{textcnn_feature_forward.1} parent=1 // pred_check_branch
      %23 = sbr.rel (0) target = $region9
    $region8: #{textcnn_feature_forward.1} parent=1 // pred_region
      %s25 = ssub.s32 4608, 4608
      %26 = vsyncadd [#allocation5], %s25
      %s27 = sshll.u32 [#allocation4], 4
      %s28 = int_to_ptr.vmem [resolvable:$true] %s27
      %33 = dma.hbm_to_vmem [thread:$0]  %s1, 4608, %s28, [#allocation5], 1152, 1152, 72
    $region9: #{textcnn_feature_forward.1} parent=1 // pred_fallthru
      _
    // Predicated region
    $region10: #{textcnn_feature_forward.1} parent=1 // pred_check
      _
    $region11: #{textcnn_feature_forward.1} parent=1 // pred_check_branch
      %35 = sbr.rel (0) target = $region13
    $region12: #{textcnn_feature_forward.1} parent=1 // pred_region
      _
    $region13: #{textcnn_feature_forward.1} parent=1 // pred_fallthru
      _
    // Predicated region
    $region14: #{textcnn_feature_forward.1} parent=1 // pred_check
      _
    $region15: #{textcnn_feature_forward.1} parent=1 // pred_check_branch
      %37 = sbr.rel (0) target = $region17
    $region16: #{textcnn_feature_forward.1} parent=1 // pred_region
      %38 = dma.done [#allocation3], 256
    $region17: #{textcnn_feature_forward.1} parent=1 // pred_fallthru
      _
    // Predicated region
    $region18: #{textcnn_feature_forward.1} parent=1 // pred_check
      _
    $region19: #{textcnn_feature_forward.1} parent=1 // pred_check_branch
      %40 = sbr.rel (0) target = $region21
    $region20: #{textcnn_feature_forward.1} parent=1 // pred_region
      %41 = dma.done [#allocation5], 4608
    $region21: #{textcnn_feature_forward.1} parent=1 // pred_fallthru
      _
    %v42 = vld [vmem:[#allocation2] sm:$0xff]
    %v43 = vld [vmem:[#allocation2 + $0x8] sm:$0xff]
    %v44 = vld [vmem:[#allocation4] sm:$0xff]
    %v45 = vld [vmem:[#allocation4 + $0x8] sm:$0xff]
    %v46 = vld [vmem:[#allocation4 + $0x10] sm:$0xff]
    %v47 = vld [vmem:[#allocation4 + $0x18] sm:$0xff]
    %v48 = vld [vmem:[#allocation4 + $0x20] sm:$0xff]
    %v49 = vld [vmem:[#allocation4 + $0x28] sm:$0xff]
    %v50 = vld [vmem:[#allocation4 + $0x30] sm:$0xff]
    %v51 = vld [vmem:[#allocation4 + $0x38] sm:$0xff]
    %v52 = vld [vmem:[#allocation4 + $0x40] sm:$0xff]
    %v53 = vld [vmem:[#allocation4 + $0x48] sm:$0xff]
    %v54 = vld [vmem:[#allocation4 + $0x50] sm:$0xff]
    %v55 = vld [vmem:[#allocation4 + $0x58] sm:$0xff]
    %v56 = vld [vmem:[#allocation4 + $0x60] sm:$0xff]
    %v57 = vld [vmem:[#allocation4 + $0x68] sm:$0xff]
    %v58 = vld [vmem:[#allocation4 + $0x70] sm:$0xff]
    %v59 = vld [vmem:[#allocation4 + $0x78] sm:$0xff]
    %v60 = vld [vmem:[#allocation4 + $0x80] sm:$0xff]
    %v61 = vld [vmem:[#allocation4 + $0x88] sm:$0xff]
    %v62 = vld [vmem:[#allocation4 + $0x90] sm:$0xff]
    %v63 = vld [vmem:[#allocation4 + $0x98] sm:$0xff]
    %v64 = vld [vmem:[#allocation4 + $0xa0] sm:$0xff]
    %v65 = vld [vmem:[#allocation4 + $0xa8] sm:$0xff]
    %v66 = vld [vmem:[#allocation4 + $0xb0] sm:$0xff]
    %v67 = vld [vmem:[#allocation4 + $0xb8] sm:$0xff]
    %v68 = vld [vmem:[#allocation4 + $0xc0] sm:$0xff]
    %v69 = vld [vmem:[#allocation4 + $0xc8] sm:$0xff]
    %v70 = vld [vmem:[#allocation4 + $0xd0] sm:$0xff]
    %v71 = vld [vmem:[#allocation4 + $0xd8] sm:$0xff]
    %v72 = vld [vmem:[#allocation4 + $0xe0] sm:$0xff]
    %v73 = vld [vmem:[#allocation4 + $0xe8] sm:$0xff]
    %v74 = vld [vmem:[#allocation4 + $0xf0] sm:$0xff]
    %v75 = vld [vmem:[#allocation4 + $0xf8] sm:$0xff]
    %v76 = vld [vmem:[#allocation4 + $0x100] sm:$0xff]
    %v77 = vld [vmem:[#allocation4 + $0x108] sm:$0xff]
    %v78 = vld [vmem:[#allocation4 + $0x110] sm:$0xff]
    %v79 = vld [vmem:[#allocation4 + $0x118] sm:$0xff]
    %vm80 = vcmask 261120
    %v82 = vsel %vm80, %v42, 0
    %v85 = vsel %vm80, %v43, 0
    %87 = vmatprep.subr.mxu0 %v45
    %88 = vmatpush1.msra.mxu0 %v44
    %89 = vmatprep.subr.mxu0 %v54
    %90 = vmatpush1.msra.mxu0 %v53
    %91 = vmatprep.subr.mxu0 %v63
    %92 = vmatpush1.msra.mxu0 %v62
    %93 = vmatprep.subr.mxu0 %v72
    %94 = vmatpush1.msra.mxu0 %v71
    %95 = vmatprep.subr.mxu0 0.0
    %96 = vmatpush1.msra.mxu0 0.0
    %97 = vmatprep.subr.mxu0 0.0
    %98 = vmatpush1.msra.mxu0 0.0
    %99 = vmatprep.subr.mxu0 0.0
    %100 = vmatpush1.msra.mxu0 0.0
    %101 = vmatprep.subr.mxu0 0.0
    %102 = vmatpush1.msra.mxu0 0.0
    %103 = vmatprep.subr.mxu0 0.0
    %104 = vmatpush1.msra.mxu0 0.0
    %105 = vmatprep.subr.mxu0 0.0
    %106 = vmatpush1.msra.mxu0 0.0
    %107 = vmatprep.subr.mxu0 0.0
    %108 = vmatpush1.msra.mxu0 0.0
    %109 = vmatprep.subr.mxu0 0.0
    %110 = vmatpush1.msra.mxu0 0.0
    %111 = vmatprep.subr.mxu0 0.0
    %112 = vmatpush1.msra.mxu0 0.0
    %113 = vmatprep.subr.mxu0 0.0
    %114 = vmatpush1.msra.mxu0 0.0
    %115 = vmatprep.subr.mxu0 0.0
    %116 = vmatpush1.msra.mxu0 0.0
    %117 = vmatprep.subr.mxu0 0.0
    %118 = vmatpush1.msra.mxu0 0.0
    %119 = vmatprep.subr.mxu0 0.0
    %120 = vmatpush1.msra.mxu0 0.0
    %121 = vmatprep.subr.mxu0 0.0
    %122 = vmatpush1.msra.mxu0 0.0
    %123 = vmatprep.subr.mxu0 0.0
    %124 = vmatpush1.msra.mxu0 0.0
    %125 = vmatprep.subr.mxu0 0.0
    %126 = vmatpush1.msra.mxu0 0.0
    %127 = vmatprep.subr.mxu0 0.0
    %128 = vmatpush1.msra.mxu0 0.0
    %129 = vmatprep.subr.mxu0 0.0
    %130 = vmatpush1.msra.mxu0 0.0
    %131 = vmatprep.subr.mxu0 0.0
    %132 = vmatpush1.msra.mxu0 0.0
    %133 = vmatprep.subr.mxu0 0.0
    %134 = vmatpush1.msra.mxu0 0.0
    %135 = vmatprep.subr.mxu0 0.0
    %136 = vmatpush1.msra.mxu0 0.0
    %137 = vmatprep.subr.mxu0 0.0
    %138 = vmatpush1.msra.mxu0 0.0
    %139 = vmatprep.subr.mxu0 0.0
    %140 = vmatpush1.msra.mxu0 0.0
    %141 = vmatprep.subr.mxu0 0.0
    %142 = vmatpush1.msra.mxu0 0.0
    %143 = vmatprep.subr.mxu0 0.0
    %144 = vmatpush1.msra.mxu0 0.0
    %145 = vmatprep.subr.mxu0 0.0
    %146 = vmatpush1.msra.mxu0 0.0
    %147 = vmatprep.subr.mxu0 0.0
    %148 = vmatpush1.msra.mxu0 0.0
    %149 = vmatprep.subr.mxu0 0.0
    %150 = vmatpush1.msra.mxu0 0.0
    %151 = vmatprep.mubr.f32.mxu0 0.0
    %152 = vmatmul.mubr.f32.gmra.mrb[0].mxu0 %v82
    %v153 = vpop.f32.mrb[0].mxu0
    %v154 = vadd.f32 0.0, %v153
    %v155 = vpop.f32.mrb[0].mxu0
    %v156 = vadd.f32 0.0, %v155
    %157 = vmatprep.mubr.f32.mxu0 0.0
    %158 = vmatmul.mubr.f32.gmra.mrb[0].mxu0 %v85
    %v159 = vpop.f32.mrb[0].mxu0
    %v160 = vadd.f32 0.0, %v159
    %v161 = vpop.f32.mrb[0].mxu0
    %v162 = vadd.f32 0.0, %v161
    %163 = vdwg.mxu0
    %164 = vmatprep.subr.mxu0 %v47
    %165 = vmatpush1.msra.mxu0 %v46
    %166 = vmatprep.subr.mxu0 %v56
    %167 = vmatpush1.msra.mxu0 %v55
    %168 = vmatprep.subr.mxu0 %v65
    %169 = vmatpush1.msra.mxu0 %v64
    %170 = vmatprep.subr.mxu0 %v74
    %171 = vmatpush1.msra.mxu0 %v73
    %172 = vmatprep.subr.mxu0 0.0
    %173 = vmatpush1.msra.mxu0 0.0
    %174 = vmatprep.subr.mxu0 0.0
    %175 = vmatpush1.msra.mxu0 0.0
    %176 = vmatprep.subr.mxu0 0.0
    %177 = vmatpush1.msra.mxu0 0.0
    %178 = vmatprep.subr.mxu0 0.0
    %179 = vmatpush1.msra.mxu0 0.0
    %180 = vmatprep.subr.mxu0 0.0
    %181 = vmatpush1.msra.mxu0 0.0
    %182 = vmatprep.subr.mxu0 0.0
    %183 = vmatpush1.msra.mxu0 0.0
    %184 = vmatprep.subr.mxu0 0.0
    %185 = vmatpush1.msra.mxu0 0.0
    %186 = vmatprep.subr.mxu0 0.0
    %187 = vmatpush1.msra.mxu0 0.0
    %188 = vmatprep.subr.mxu0 0.0
    %189 = vmatpush1.msra.mxu0 0.0
    %190 = vmatprep.subr.mxu0 0.0
    %191 = vmatpush1.msra.mxu0 0.0
    %192 = vmatprep.subr.mxu0 0.0
    %193 = vmatpush1.msra.mxu0 0.0
    %194 = vmatprep.subr.mxu0 0.0
    %195 = vmatpush1.msra.mxu0 0.0
    %196 = vmatprep.subr.mxu0 0.0
    %197 = vmatpush1.msra.mxu0 0.0
    %198 = vmatprep.subr.mxu0 0.0
    %199 = vmatpush1.msra.mxu0 0.0
    %200 = vmatprep.subr.mxu0 0.0
    %201 = vmatpush1.msra.mxu0 0.0
    %202 = vmatprep.subr.mxu0 0.0
    %203 = vmatpush1.msra.mxu0 0.0
    %204 = vmatprep.subr.mxu0 0.0
    %205 = vmatpush1.msra.mxu0 0.0
    %206 = vmatprep.subr.mxu0 0.0
    %207 = vmatpush1.msra.mxu0 0.0
    %208 = vmatprep.subr.mxu0 0.0
    %209 = vmatpush1.msra.mxu0 0.0
    %210 = vmatprep.subr.mxu0 0.0
    %211 = vmatpush1.msra.mxu0 0.0
    %212 = vmatprep.subr.mxu0 0.0
    %213 = vmatpush1.msra.mxu0 0.0
    %214 = vmatprep.subr.mxu0 0.0
    %215 = vmatpush1.msra.mxu0 0.0
    %216 = vmatprep.subr.mxu0 0.0
    %217 = vmatpush1.msra.mxu0 0.0
    %218 = vmatprep.subr.mxu0 0.0
    %219 = vmatpush1.msra.mxu0 0.0
    %220 = vmatprep.subr.mxu0 0.0
    %221 = vmatpush1.msra.mxu0 0.0
    %222 = vmatprep.subr.mxu0 0.0
    %223 = vmatpush1.msra.mxu0 0.0
    %224 = vmatprep.subr.mxu0 0.0
    %225 = vmatpush1.msra.mxu0 0.0
    %226 = vmatprep.subr.mxu0 0.0
    %227 = vmatpush1.msra.mxu0 0.0
    %228 = vmatprep.mubr.f32.mxu0 0.0
    %229 = vmatmul.mubr.f32.gmra.mrb[0].mxu0 %v82
    %v230 = vpop.f32.mrb[0].mxu0
    %v231 = vadd.f32 0.0, %v230
    %v232 = vpop.f32.mrb[0].mxu0
    %v233 = vadd.f32 0.0, %v232
    %234 = vmatprep.mubr.f32.mxu0 0.0
    %235 = vmatmul.mubr.f32.gmra.mrb[0].mxu0 %v85
    %v236 = vpop.f32.mrb[0].mxu0
    %v237 = vadd.f32 0.0, %v236
    %v238 = vpop.f32.mrb[0].mxu0
    %v239 = vadd.f32 0.0, %v238
    %240 = vdwg.mxu0
    %241 = vmatprep.subr.mxu0 %v49
    %242 = vmatpush1.msra.mxu0 %v48
    %243 = vmatprep.subr.mxu0 %v58
    %244 = vmatpush1.msra.mxu0 %v57
    %245 = vmatprep.subr.mxu0 %v67
    %246 = vmatpush1.msra.mxu0 %v66
    %247 = vmatprep.subr.mxu0 %v76
    %248 = vmatpush1.msra.mxu0 %v75
    %249 = vmatprep.subr.mxu0 0.0
    %250 = vmatpush1.msra.mxu0 0.0
    %251 = vmatprep.subr.mxu0 0.0
    %252 = vmatpush1.msra.mxu0 0.0
    %253 = vmatprep.subr.mxu0 0.0
    %254 = vmatpush1.msra.mxu0 0.0
    %255 = vmatprep.subr.mxu0 0.0
    %256 = vmatpush1.msra.mxu0 0.0
    %257 = vmatprep.subr.mxu0 0.0
    %258 = vmatpush1.msra.mxu0 0.0
    %259 = vmatprep.subr.mxu0 0.0
    %260 = vmatpush1.msra.mxu0 0.0
    %261 = vmatprep.subr.mxu0 0.0
    %262 = vmatpush1.msra.mxu0 0.0
    %263 = vmatprep.subr.mxu0 0.0
    %264 = vmatpush1.msra.mxu0 0.0
    %265 = vmatprep.subr.mxu0 0.0
    %266 = vmatpush1.msra.mxu0 0.0
    %267 = vmatprep.subr.mxu0 0.0
    %268 = vmatpush1.msra.mxu0 0.0
    %269 = vmatprep.subr.mxu0 0.0
    %270 = vmatpush1.msra.mxu0 0.0
    %271 = vmatprep.subr.mxu0 0.0
    %272 = vmatpush1.msra.mxu0 0.0
    %273 = vmatprep.subr.mxu0 0.0
    %274 = vmatpush1.msra.mxu0 0.0
    %275 = vmatprep.subr.mxu0 0.0
    %276 = vmatpush1.msra.mxu0 0.0
    %277 = vmatprep.subr.mxu0 0.0
    %278 = vmatpush1.msra.mxu0 0.0
    %279 = vmatprep.subr.mxu0 0.0
    %280 = vmatpush1.msra.mxu0 0.0
    %281 = vmatprep.subr.mxu0 0.0
    %282 = vmatpush1.msra.mxu0 0.0
    %283 = vmatprep.subr.mxu0 0.0
    %284 = vmatpush1.msra.mxu0 0.0
    %285 = vmatprep.subr.mxu0 0.0
    %286 = vmatpush1.msra.mxu0 0.0
    %287 = vmatprep.subr.mxu0 0.0
    %288 = vmatpush1.msra.mxu0 0.0
    %289 = vmatprep.subr.mxu0 0.0
    %290 = vmatpush1.msra.mxu0 0.0
    %291 = vmatprep.subr.mxu0 0.0
    %292 = vmatpush1.msra.mxu0 0.0
    %293 = vmatprep.subr.mxu0 0.0
    %294 = vmatpush1.msra.mxu0 0.0
    %295 = vmatprep.subr.mxu0 0.0
    %296 = vmatpush1.msra.mxu0 0.0
    %297 = vmatprep.subr.mxu0 0.0
    %298 = vmatpush1.msra.mxu0 0.0
    %299 = vmatprep.subr.mxu0 0.0
    %300 = vmatpush1.msra.mxu0 0.0
    %301 = vmatprep.subr.mxu0 0.0
    %302 = vmatpush1.msra.mxu0 0.0
    %303 = vmatprep.subr.mxu0 0.0
    %304 = vmatpush1.msra.mxu0 0.0
    %305 = vmatprep.mubr.f32.mxu0 0.0
    %306 = vmatmul.mubr.f32.gmra.mrb[0].mxu0 %v82
    %v307 = vpop.f32.mrb[0].mxu0
    %v308 = vadd.f32 0.0, %v307
    %v309 = vpop.f32.mrb[0].mxu0
    %v310 = vadd.f32 0.0, %v309
    %311 = vmatprep.mubr.f32.mxu0 0.0
    %312 = vmatmul.mubr.f32.gmra.mrb[0].mxu0 %v85
    %v313 = vpop.f32.mrb[0].mxu0
    %v314 = vadd.f32 0.0, %v313
    %v315 = vpop.f32.mrb[0].mxu0
    %v316 = vadd.f32 0.0, %v315
    %317 = vdwg.mxu0
    %318 = vmatprep.subr.mxu0 %v51
    %319 = vmatpush1.msra.mxu0 %v50
    %320 = vmatprep.subr.mxu0 %v60
    %321 = vmatpush1.msra.mxu0 %v59
    %322 = vmatprep.subr.mxu0 %v69
    %323 = vmatpush1.msra.mxu0 %v68
    %324 = vmatprep.subr.mxu0 %v78
    %325 = vmatpush1.msra.mxu0 %v77
    %326 = vmatprep.subr.mxu0 0.0
    %327 = vmatpush1.msra.mxu0 0.0
    %328 = vmatprep.subr.mxu0 0.0
    %329 = vmatpush1.msra.mxu0 0.0
    %330 = vmatprep.subr.mxu0 0.0
    %331 = vmatpush1.msra.mxu0 0.0
    %332 = vmatprep.subr.mxu0 0.0
    %333 = vmatpush1.msra.mxu0 0.0
    %334 = vmatprep.subr.mxu0 0.0
    %335 = vmatpush1.msra.mxu0 0.0
    %336 = vmatprep.subr.mxu0 0.0
    %337 = vmatpush1.msra.mxu0 0.0
    %338 = vmatprep.subr.mxu0 0.0
    %339 = vmatpush1.msra.mxu0 0.0
    %340 = vmatprep.subr.mxu0 0.0
    %341 = vmatpush1.msra.mxu0 0.0
    %342 = vmatprep.subr.mxu0 0.0
    %343 = vmatpush1.msra.mxu0 0.0
    %344 = vmatprep.subr.mxu0 0.0
    %345 = vmatpush1.msra.mxu0 0.0
    %346 = vmatprep.subr.mxu0 0.0
    %347 = vmatpush1.msra.mxu0 0.0
    %348 = vmatprep.subr.mxu0 0.0
    %349 = vmatpush1.msra.mxu0 0.0
    %350 = vmatprep.subr.mxu0 0.0
    %351 = vmatpush1.msra.mxu0 0.0
    %352 = vmatprep.subr.mxu0 0.0
    %353 = vmatpush1.msra.mxu0 0.0
    %354 = vmatprep.subr.mxu0 0.0
    %355 = vmatpush1.msra.mxu0 0.0
    %356 = vmatprep.subr.mxu0 0.0
    %357 = vmatpush1.msra.mxu0 0.0
    %358 = vmatprep.subr.mxu0 0.0
    %359 = vmatpush1.msra.mxu0 0.0
    %360 = vmatprep.subr.mxu0 0.0
    %361 = vmatpush1.msra.mxu0 0.0
    %362 = vmatprep.subr.mxu0 0.0
    %363 = vmatpush1.msra.mxu0 0.0
    %364 = vmatprep.subr.mxu0 0.0
    %365 = vmatpush1.msra.mxu0 0.0
    %366 = vmatprep.subr.mxu0 0.0
    %367 = vmatpush1.msra.mxu0 0.0
    %368 = vmatprep.subr.mxu0 0.0
    %369 = vmatpush1.msra.mxu0 0.0
    %370 = vmatprep.subr.mxu0 0.0
    %371 = vmatpush1.msra.mxu0 0.0
    %372 = vmatprep.subr.mxu0 0.0
    %373 = vmatpush1.msra.mxu0 0.0
    %374 = vmatprep.subr.mxu0 0.0
    %375 = vmatpush1.msra.mxu0 0.0
    %376 = vmatprep.subr.mxu0 0.0
    %377 = vmatpush1.msra.mxu0 0.0
    %378 = vmatprep.subr.mxu0 0.0
    %379 = vmatpush1.msra.mxu0 0.0
    %380 = vmatprep.subr.mxu0 0.0
    %381 = vmatpush1.msra.mxu0 0.0
    %382 = vmatprep.mubr.f32.mxu0 0.0
    %383 = vmatmul.mubr.f32.gmra.mrb[0].mxu0 %v82
    %v384 = vpop.f32.mrb[0].mxu0
    %v385 = vadd.f32 0.0, %v384
    %v386 = vpop.f32.mrb[0].mxu0
    %v387 = vadd.f32 0.0, %v386
    %388 = vmatprep.mubr.f32.mxu0 0.0
    %389 = vmatmul.mubr.f32.gmra.mrb[0].mxu0 %v85
    %v390 = vpop.f32.mrb[0].mxu0
    %v391 = vadd.f32 0.0, %v390
    %v392 = vpop.f32.mrb[0].mxu0
    %v393 = vadd.f32 0.0, %v392
    %394 = vdwg.mxu0
    %395 = vmatprep.subr.mxu0 0.0
    %396 = vmatpush1.msra.mxu0 %v52
    %397 = vmatprep.subr.mxu0 0.0
    %398 = vmatpush1.msra.mxu0 %v61
    %399 = vmatprep.subr.mxu0 0.0
    %400 = vmatpush1.msra.mxu0 %v70
    %401 = vmatprep.subr.mxu0 0.0
    %402 = vmatpush1.msra.mxu0 %v79
    %403 = vmatprep.subr.mxu0 0.0
    %404 = vmatpush1.msra.mxu0 0.0
    %405 = vmatprep.subr.mxu0 0.0
    %406 = vmatpush1.msra.mxu0 0.0
    %407 = vmatprep.subr.mxu0 0.0
    %408 = vmatpush1.msra.mxu0 0.0
    %409 = vmatprep.subr.mxu0 0.0
    %410 = vmatpush1.msra.mxu0 0.0
    %411 = vmatprep.subr.mxu0 0.0
    %412 = vmatpush1.msra.mxu0 0.0
    %413 = vmatprep.subr.mxu0 0.0
    %414 = vmatpush1.msra.mxu0 0.0
    %415 = vmatprep.subr.mxu0 0.0
    %416 = vmatpush1.msra.mxu0 0.0
    %417 = vmatprep.subr.mxu0 0.0
    %418 = vmatpush1.msra.mxu0 0.0
    %419 = vmatprep.subr.mxu0 0.0
    %420 = vmatpush1.msra.mxu0 0.0
    %421 = vmatprep.subr.mxu0 0.0
    %422 = vmatpush1.msra.mxu0 0.0
    %423 = vmatprep.subr.mxu0 0.0
    %424 = vmatpush1.msra.mxu0 0.0
    %425 = vmatprep.subr.mxu0 0.0
    %426 = vmatpush1.msra.mxu0 0.0
    %427 = vmatprep.subr.mxu0 0.0
    %428 = vmatpush1.msra.mxu0 0.0
    %429 = vmatprep.subr.mxu0 0.0
    %430 = vmatpush1.msra.mxu0 0.0
    %431 = vmatprep.subr.mxu0 0.0
    %432 = vmatpush1.msra.mxu0 0.0
    %433 = vmatprep.subr.mxu0 0.0
    %434 = vmatpush1.msra.mxu0 0.0
    %435 = vmatprep.subr.mxu0 0.0
    %436 = vmatpush1.msra.mxu0 0.0
    %437 = vmatprep.subr.mxu0 0.0
    %438 = vmatpush1.msra.mxu0 0.0
    %439 = vmatprep.subr.mxu0 0.0
    %440 = vmatpush1.msra.mxu0 0.0
    %441 = vmatprep.subr.mxu0 0.0
    %442 = vmatpush1.msra.mxu0 0.0
    %443 = vmatprep.subr.mxu0 0.0
    %444 = vmatpush1.msra.mxu0 0.0
    %445 = vmatprep.subr.mxu0 0.0
    %446 = vmatpush1.msra.mxu0 0.0
    %447 = vmatprep.subr.mxu0 0.0
    %448 = vmatpush1.msra.mxu0 0.0
    %449 = vmatprep.subr.mxu0 0.0
    %450 = vmatpush1.msra.mxu0 0.0
    %451 = vmatprep.subr.mxu0 0.0
    %452 = vmatpush1.msra.mxu0 0.0
    %453 = vmatprep.subr.mxu0 0.0
    %454 = vmatpush1.msra.mxu0 0.0
    %455 = vmatprep.subr.mxu0 0.0
    %456 = vmatpush1.msra.mxu0 0.0
    %457 = vmatprep.subr.mxu0 0.0
    %458 = vmatpush1.msra.mxu0 0.0
    %459 = vmatprep.mubr.f32.mxu0 0.0
    %460 = vmatmul.mubr.f32.gmra.mrb[0].mxu0 %v82
    %v461 = vpop.f32.mrb[0].mxu0
    %v462 = vadd.f32 0.0, %v461
    %v463 = vpop.f32.mrb[0].mxu0
    %464 = vmatprep.mubr.f32.mxu0 0.0
    %465 = vmatmul.mubr.f32.gmra.mrb[0].mxu0 %v85
    %v466 = vpop.f32.mrb[0].mxu0
    %v467 = vadd.f32 0.0, %v466
    %v468 = vpop.f32.mrb[0].mxu0
    %469 = vdwg.mxu0
    %v472 = vrot.slane %v156, 1
    %v473 = vrot.slane %v162, 1
    %v476 = vadd.f32 %v154, %v472
    %v477 = vadd.f32 %v160, %v473
    %vm478 = vcmask 1046528
    %v479 = vsel %vm478, %v476, -inf
    %v480 = vrot.slane %v479, 4
    %v481 = vmax.f32 %v479, %v480
    %v482 = vrot.slane %v481, 2
    %v483 = vmax.f32 %v481, %v482
    %v484 = vrot.slane %v483, 1
    %v485 = vmax.f32 %v483, %v484
    %v486 = vsel %vm478, %v477, -inf
    %v487 = vrot.slane %v486, 4
    %v488 = vmax.f32 %v486, %v487
    %v489 = vrot.slane %v488, 2
    %v490 = vmax.f32 %v488, %v489
    %v491 = vrot.slane %v490, 1
    %v492 = vmax.f32 %v490, %v491
    %v493 = vld [vmem:[%s2] sm:$0x1]
    %v495 = vlaneseq
    %v496 = vshrl.u32 %v495, 7
    %v497 = vsub.s32 0, %v496
    %v498 = vrot.slane %v493, %v497
    %v500 = vadd.f32 %v485, %v498
    %v501 = vadd.f32 %v492, %v498
    %v502 = vmax.f32 %v500, 0.0
    %v503 = vmax.f32 %v501, 0.0
    %v507 = vunpack.c.l.s4 1983009808
    %v508 = vunpack.c.0.s8 %v507
    %v509 = vlaneseq
    %v510 = vshrl.u32 %v509, 7
    %v511 = vsub.s32 %v508, %v510
    %v512 = vrot.slane %v502, %v511
    %v514 = vunpack.c.l.s4 1983009808
    %v515 = vunpack.c.0.s8 %v514
    %v516 = vlaneseq
    %v517 = vshrl.u32 %v516, 7
    %v518 = vsub.s32 %v515, %v517
    %v519 = vrot.slane %v503, %v518
    %vm520 = vcmask 1044484
    %v521 = vsel %vm520, %v512, %v512
    %vm522 = vcmask 1046534
    %v523 = vsel %vm522, %v512, %v521
    %v524 = vrot.slane %v519, 7
    %vm525 = vcmask 1041409
    %v526 = vsel %vm525, %v524, %v523
    %vm527 = vcmask 1043459
    %v528 = vsel %vm527, %v524, %v526
    %vm529 = vcmask 1045509
    %v530 = vsel %vm529, %v524, %v528
    %vm531 = vcmask 1047559
    %v532 = vsel %vm531, %v524, %v530
    %534 = vst [vmem:[%s3] sm:$0x3] %v532
    %v537 = vrot.slane %v233, 1
    %v538 = vrot.slane %v239, 1
    %v541 = vadd.f32 %v231, %v537
    %v542 = vadd.f32 %v237, %v538
    %v545 = vrot.slane %v308, 2
    %v546 = vrot.slane %v314, 2
    %v549 = vadd.f32 %v541, %v545
    %v550 = vadd.f32 %v542, %v546
    %vm551 = vcmask 1045504
    %v552 = vsel %vm551, %v549, -inf
    %v553 = vrot.slane %v552, 4
    %v554 = vmax.f32 %v552, %v553
    %v555 = vrot.slane %v554, 2
    %v556 = vmax.f32 %v554, %v555
    %v557 = vrot.slane %v556, 1
    %v558 = vmax.f32 %v556, %v557
    %v559 = vsel %vm551, %v550, -inf
    %v560 = vrot.slane %v559, 4
    %v561 = vmax.f32 %v559, %v560
    %v562 = vrot.slane %v561, 2
    %v563 = vmax.f32 %v561, %v562
    %v564 = vrot.slane %v563, 1
    %v565 = vmax.f32 %v563, %v564
    %v566 = vld [vmem:[%s2 + $0x1] sm:$0x1]
    %v568 = vlaneseq
    %v569 = vshrl.u32 %v568, 7
    %v570 = vsub.s32 0, %v569
    %v571 = vrot.slane %v566, %v570
    %v573 = vadd.f32 %v558, %v571
    %v574 = vadd.f32 %v565, %v571
    %v575 = vmax.f32 %v573, 0.0
    %v576 = vmax.f32 %v574, 0.0
    %v580 = vunpack.c.l.s4 1983009808
    %v581 = vunpack.c.0.s8 %v580
    %v582 = vlaneseq
    %v583 = vshrl.u32 %v582, 7
    %v584 = vsub.s32 %v581, %v583
    %v585 = vrot.slane %v575, %v584
    %v587 = vunpack.c.l.s4 1983009808
    %v588 = vunpack.c.0.s8 %v587
    %v589 = vlaneseq
    %v590 = vshrl.u32 %v589, 7
    %v591 = vsub.s32 %v588, %v590
    %v592 = vrot.slane %v576, %v591
    %v593 = vsel %vm520, %v585, %v585
    %v594 = vsel %vm522, %v585, %v593
    %v595 = vrot.slane %v592, 7
    %v596 = vsel %vm525, %v595, %v594
    %v597 = vsel %vm527, %v595, %v596
    %v598 = vsel %vm529, %v595, %v597
    %v599 = vsel %vm531, %v595, %v598
    %601 = vst [vmem:[%s3 + $0x2] sm:$0x3] %v599
    %v604 = vrot.slane %v385, 1
    %v605 = vrot.slane %v391, 1
    %v608 = vadd.f32 %v310, %v604
    %v609 = vadd.f32 %v316, %v605
    %v612 = vrot.slane %v387, 2
    %v613 = vrot.slane %v393, 2
    %v616 = vadd.f32 %v608, %v612
    %v617 = vadd.f32 %v609, %v613
    %v620 = vrot.slane %v462, 3
    %v621 = vrot.slane %v467, 3
    %v624 = vadd.f32 %v616, %v620
    %v625 = vadd.f32 %v617, %v621
    %vm626 = vcmask 1044480
    %v627 = vsel %vm626, %v624, -inf
    %v628 = vrot.slane %v627, 4
    %v629 = vmax.f32 %v627, %v628
    %v630 = vrot.slane %v629, 2
    %v631 = vmax.f32 %v629, %v630
    %v632 = vrot.slane %v631, 1
    %v633 = vmax.f32 %v631, %v632
    %v634 = vsel %vm626, %v625, -inf
    %v635 = vrot.slane %v634, 4
    %v636 = vmax.f32 %v634, %v635
    %v637 = vrot.slane %v636, 2
    %v638 = vmax.f32 %v636, %v637
    %v639 = vrot.slane %v638, 1
    %v640 = vmax.f32 %v638, %v639
    %v641 = vld [vmem:[%s2 + $0x2] sm:$0x1]
    %v643 = vlaneseq
    %v644 = vshrl.u32 %v643, 7
    %v645 = vsub.s32 0, %v644
    %v646 = vrot.slane %v641, %v645
    %v648 = vadd.f32 %v633, %v646
    %v649 = vadd.f32 %v640, %v646
    %v650 = vmax.f32 %v648, 0.0
    %v651 = vmax.f32 %v649, 0.0
    %v655 = vunpack.c.l.s4 1983009808
    %v656 = vunpack.c.0.s8 %v655
    %v657 = vlaneseq
    %v658 = vshrl.u32 %v657, 7
    %v659 = vsub.s32 %v656, %v658
    %v660 = vrot.slane %v650, %v659
    %v662 = vunpack.c.l.s4 1983009808
    %v663 = vunpack.c.0.s8 %v662
    %v664 = vlaneseq
    %v665 = vshrl.u32 %v664, 7
    %v666 = vsub.s32 %v663, %v665
    %v667 = vrot.slane %v651, %v666
    %v668 = vsel %vm520, %v660, %v660
    %v669 = vsel %vm522, %v660, %v668
    %v670 = vrot.slane %v667, 7
    %v671 = vsel %vm525, %v670, %v669
    %v672 = vsel %vm527, %v670, %v671
    %v673 = vsel %vm529, %v670, %v672
    %v674 = vsel %vm531, %v670, %v673
    %676 = vst [vmem:[%s3 + $0x4] sm:$0x3] %v674
    // Predicated region
    $region22: #{textcnn_feature_forward.1} parent=1 // pred_check
      _
    $region23: #{textcnn_feature_forward.1} parent=1 // pred_check_branch
      %678 = sbr.rel (0) target = $region25
    $region24: #{textcnn_feature_forward.1} parent=1 // pred_region
      _
    $region25: #{textcnn_feature_forward.1} parent=1 // pred_fallthru
      _
    // Predicated region
    $region26: #{textcnn_feature_forward.1} parent=1 // pred_check
      _
    $region27: #{textcnn_feature_forward.1} parent=1 // pred_check_branch
      %680 = sbr.rel (0) target = $region29
    $region28: #{textcnn_feature_forward.1} parent=1 // pred_region
      _
    $region29: #{textcnn_feature_forward.1} parent=1 // pred_fallthru
      _
    %681 = vsyncpa [#allocation3], 1
    %682 = vsyncpa [#allocation5], 1

</llo_original>
